<compile_context>
chip_gen: v6e
topology: v6e:2x2x1
jax: 0.10.0
libtpu: 0.0.40
codegen_flags: <defaults>
</compile_context>

<pallas_src>
import functools
import math

import jax
import jax.numpy as jnp
from jax.experimental import pallas as pl
from jax.experimental.pallas import tpu as pltpu


# ----------------------------------------------------------------------------
# Deterministic 1-D Gaussian taps (matches torch `gaussian(window_size, 1.5)`)
# Computed with plain Python floats -> compile-time constants.
# ----------------------------------------------------------------------------
def _gaussian_taps(window_size: int, sigma: float = 1.5):
    g = [math.exp(-((x - window_size // 2) ** 2) / (2.0 * sigma ** 2))
         for x in range(window_size)]
    s = sum(g)
    return tuple(v / s for v in g)


def _banded_blur_matrix(n: int, taps) -> jnp.ndarray:
    """(n, n) banded matrix B with B[i, j] = taps[j - i + pad] inside the band.

    A_H @ X blurs X along axis 0 and X @ A_W blurs along axis 1, with the same
    zero-padding semantics as F.conv2d(padding=window_size // 2)."""
    win = len(taps)
    pad = win // 2
    t = jnp.asarray(taps, dtype=jnp.float32)
    idx = jnp.arange(n)
    d = idx[None, :] - idx[:, None] + pad            # j - i + pad
    valid = (d >= 0) & (d < win)
    return jnp.where(valid, t[jnp.clip(d, 0, win - 1)], 0.0).astype(jnp.float32)


# ----------------------------------------------------------------------------
# Pallas kernel: one batch of PB (n, c)-planes per grid step.
# ----------------------------------------------------------------------------
def _ssim_block_kernel(x1_ref, x2_ref, ah_ref, aw_ref, out_ref, *, PB, H, W):
    C1 = 0.01 ** 2
    C2 = 0.03 ** 2

    # Cast after the DMA lands (inputs may be bf16).
    a = x1_ref[...].astype(jnp.float32)              # (PB, H, W)
    b = x2_ref[...].astype(jnp.float32)
    ah = ah_ref[...]                                 # (H, H) banded Gaussian
    aw = aw_ref[...]                                 # (W, W) banded Gaussian

    # ---- W-pass on the MXU: one (PB*H, W) @ (W, W) matmul per operand ----
    def blur_w(x):
        y = jnp.dot(x.reshape(PB * H, W), aw, preferred_element_type=jnp.float32)
        return y.reshape(PB, H, W)

    t1, t2 = blur_w(a), blur_w(b)
    # Products hoisted: computed once per block, then blurred.
    t11, t22, t12 = blur_w(a * a), blur_w(b * b), blur_w(a * b)

    # ---- H-pass on the MXU + elementwise SSIM map, accumulated per plane ----
    acc = jnp.zeros((H, W), jnp.float32)
    for p in range(PB):                              # statically unrolled, PB <= 8
        mu1 = jnp.dot(ah, t1[p], preferred_element_type=jnp.float32)
        mu2 = jnp.dot(ah, t2[p], preferred_element_type=jnp.float32)
        s11 = jnp.dot(ah, t11[p], preferred_element_type=jnp.float32)
        s22 = jnp.dot(ah, t22[p], preferred_element_type=jnp.float32)
        s12 = jnp.dot(ah, t12[p], preferred_element_type=jnp.float32)

        mu1_sq = mu1 * mu1
        mu2_sq = mu2 * mu2
        mu1_mu2 = mu1 * mu2
        sigma1_sq = s11 - mu1_sq
        sigma2_sq = s22 - mu2_sq
        sigma12 = s12 - mu1_mu2

        num = (2.0 * mu1_mu2 + C1) * (2.0 * sigma12 + C2)
        den = (mu1_sq + mu2_sq + C1) * (sigma1_sq + sigma2_sq + C2)
        acc = acc + num / den

    total = jnp.sum(acc)                             # single XLU reduce per step

    # Partial sum goes into element [0, 0] of a lane-dense, (8,128)-aligned
    # tile (rest zero) so the wrapper can reduce with a dense jnp.sum.
    r = jax.lax.broadcasted_iota(jnp.int32, (8, 128), 0)
    c = jax.lax.broadcasted_iota(jnp.int32, (8, 128), 1)
    tile = jnp.where((r == 0) & (c == 0), total, 0.0)
    out_ref[...] = tile.reshape(out_ref.shape)


# ----------------------------------------------------------------------------
# Wrapper (equivalent to SSIM(window_size=11, size_average=True).forward)
# ----------------------------------------------------------------------------
def _pick_plane_block(NC: int, H: int, W: int, vmem_budget_bytes: int) -> int:
    # Rough per-plane f32 footprint inside one step:
    #   2 inputs double-buffered (4) + a,b (2) + 3 products + 5 W-pass results.
    per_plane = 14 * H * W * 4
    best = 1
    for pb in range(1, min(NC, 8) + 1):
        if NC % pb:
            continue
        if NC >= 2 and NC // pb < 2:       # keep >=2 grid steps for megacore
            continue
        if pb * per_plane > vmem_budget_bytes:
            continue
        best = pb
    return best


def ssim_pallas(img1: jnp.ndarray, img2: jnp.ndarray, window_size: int = 11):
    assert img1.shape == img2.shape and img1.ndim == 4
    N, C, H, W = img1.shape
    NC = N * C
    taps = _gaussian_taps(window_size)

    # Keep bf16/f32 inputs as-is (cast in-kernel); other dtypes cast here.
    if img1.dtype not in (jnp.dtype(jnp.float32), jnp.dtype(jnp.bfloat16)):
        img1 = img1.astype(jnp.float32)
        img2 = img2.astype(jnp.float32)
    x1 = img1.reshape(NC, H, W)
    x2 = img2.reshape(NC, H, W)

    ah = _banded_blur_matrix(H, taps)      # left-blur along H
    aw = _banded_blur_matrix(W, taps)      # right-blur along W

    VMEM_BUDGET = 40 * 1024 * 1024         # safe on v5e/v6e (128 MiB) and v7x (64 MiB)
    PB = _pick_plane_block(NC, H, W, VMEM_BUDGET)
    G = NC // PB

    est = (4 * PB * H * W * x1.dtype.itemsize     # pipelined input blocks
           + 10 * PB * H * W * 4                  # in-kernel f32 intermediates
           + 2 * (H * H + W * W) * 4              # blur matrices
           + 2 * 8 * 128 * 4)                     # output tile
    vmem_limit = int(min(56 * 1024 * 1024, max(32 * 1024 * 1024, 2 * est)))

    kernel = functools.partial(_ssim_block_kernel, PB=PB, H=H, W=W)

    partials = pl.pallas_call(
        kernel,
        out_shape=jax.ShapeDtypeStruct((G, 8, 128), jnp.float32),
        grid_spec=pltpu.PrefetchScalarGridSpec(
            num_scalar_prefetch=0,
            grid=(G,),
            in_specs=[
                pl.BlockSpec((PB, H, W), lambda i: (i, 0, 0)),   # img1 planes
                pl.BlockSpec((PB, H, W), lambda i: (i, 0, 0)),   # img2 planes
                pl.BlockSpec((H, H), lambda i: (0, 0)),          # A_H (resident)
                pl.BlockSpec((W, W), lambda i: (0, 0)),          # A_W (resident)
            ],
            out_specs=pl.BlockSpec((1, 8, 128), lambda i: (i, 0, 0)),
        ),
        compiler_params=pltpu.CompilerParams(
            dimension_semantics=("parallel",),   # independent steps -> megacore
            vmem_limit_bytes=vmem_limit,
        ),
    )(x1, x2, ah, aw)

    # size_average=True -> mean over all N*C*H*W elements of the SSIM map.
    total = jnp.sum(partials)                    # dense read, no strided gather
    return total / jnp.float32(NC * H * W)


# ----------------------------------------------------------------------------
# Pure-JAX reference (mirrors the PyTorch _ssim with F.conv2d, groups=C)
# ----------------------------------------------------------------------------
def gaussian_window_2d(window_size: int, sigma: float = 1.5) -> jnp.ndarray:
    xs = jnp.arange(window_size, dtype=jnp.float32)
    g = jnp.exp(-((xs - window_size // 2) ** 2) / (2.0 * sigma ** 2))
    g = g / jnp.sum(g)
    return jnp.outer(g, g)


def ssim_reference(img1, img2, window_size: int = 11):
    N, C, H, W = img1.shape
    pad = window_size // 2
    window2d = gaussian_window_2d(window_size)
    w = jnp.broadcast_to(window2d, (C, 1, window_size, window_size))

    def conv(x):
        return jax.lax.conv_general_dilated(
            x, w, window_strides=(1, 1),
            padding=[(pad, pad), (pad, pad)],
            dimension_numbers=("NCHW", "OIHW", "NCHW"),
            feature_group_count=C,
            precision=jax.lax.Precision.HIGHEST,
        )

    mu1 = conv(img1)
    mu2 = conv(img2)
    mu1_sq = mu1 ** 2
    mu2_sq = mu2 ** 2
    mu1_mu2 = mu1 * mu2
    sigma1_sq = conv(img1 * img1) - mu1_sq
    sigma2_sq = conv(img2 * img2) - mu2_sq
    sigma12 = conv(img1 * img2) - mu1_mu2
    C1 = 0.01 ** 2
    C2 = 0.03 ** 2
    ssim_map = ((2 * mu1_mu2 + C1) * (2 * sigma12 + C2)) / (
        (mu1_sq + mu2_sq + C1) * (sigma1_sq + sigma2_sq + C2)
    )
    return jnp.mean(ssim_map)


if __name__ == "__main__":
    key = jax.random.PRNGKey(0)
    k1, k2 = jax.random.split(key)
    # Module default channel count is 3 (SSIM.__init__); small spatial size.
    img1 = jax.random.uniform(k1, (2, 3, 16, 16), dtype=jnp.float32)
    img2 = jax.random.uniform(k2, (2, 3, 16, 16), dtype=jnp.float32)

    out = ssim_pallas(img1, img2, window_size=11)
    out = jax.block_until_ready(out)

    ref = jax.block_until_ready(ssim_reference(img1, img2, window_size=11))
    assert jnp.allclose(out, ref, rtol=1e-4, atol=1e-5), (out, ref)

    print("KERNEL_OK")
</pallas_src>

<mosaic_0001>
module attributes {stable_mosaic.version = 11 : i64} {
  func.func @_ssim_block_kernel(%arg0: i32, %arg1: memref<3x16x16xf32, #tpu.memory_space<vmem>>, %arg2: memref<3x16x16xf32, #tpu.memory_space<vmem>>, %arg3: memref<16x16xf32, #tpu.memory_space<vmem>>, %arg4: memref<16x16xf32, #tpu.memory_space<vmem>>, %arg5: memref<1x8x128xf32, #tpu.memory_space<vmem>>) attributes {dimension_semantics = [#tpu.dimension_semantics<parallel>], iteration_bounds = array<i64: 2>, scalar_prefetch = 0 : i64, scratch_operands = 0 : i64, tpu.core_type = #tpu.core_type<tc>, window_params = [{transform_indices = @transform_0, window_bounds = array<i64: 3, 16, 16>}, {transform_indices = @transform_1, window_bounds = array<i64: 3, 16, 16>}, {pipeline_mode = #tpu.pipeline_mode<synchronous>, transform_indices = @transform_2, window_bounds = array<i64: 16, 16>}, {pipeline_mode = #tpu.pipeline_mode<synchronous>, transform_indices = @transform_3, window_bounds = array<i64: 16, 16>}, {transform_indices = @transform_4, window_bounds = array<i64: 1, 8, 128>}]} {
    %c0 = arith.constant 0 : index
    %c0_0 = arith.constant 0 : index
    %c0_1 = arith.constant 0 : index
    %0 = vector.load %arg1[%c0, %c0_0, %c0_1] : memref<3x16x16xf32, #tpu.memory_space<vmem>>, vector<3x16x16xf32>
    %c0_2 = arith.constant 0 : index
    %c0_3 = arith.constant 0 : index
    %c0_4 = arith.constant 0 : index
    %1 = vector.load %arg2[%c0_2, %c0_3, %c0_4] : memref<3x16x16xf32, #tpu.memory_space<vmem>>, vector<3x16x16xf32>
    %c0_5 = arith.constant 0 : index
    %c0_6 = arith.constant 0 : index
    %2 = vector.load %arg3[%c0_5, %c0_6] : memref<16x16xf32, #tpu.memory_space<vmem>>, vector<16x16xf32>
    %c0_7 = arith.constant 0 : index
    %c0_8 = arith.constant 0 : index
    %3 = vector.load %arg4[%c0_7, %c0_8] : memref<16x16xf32, #tpu.memory_space<vmem>>, vector<16x16xf32>
    %4 = vector.shape_cast %0 : vector<3x16x16xf32> to vector<48x16xf32>
    %cst = arith.constant dense<0.000000e+00> : vector<48x16xf32>
    %5 = tpu.matmul %4, %3, %cst {dimension_numbers = #tpu.dot_dimension_numbers<[1], [0], [0], [1], [0, 0, 1, 1], [], []>} : vector<48x16xf32>, vector<16x16xf32>, vector<48x16xf32> -> vector<48x16xf32>
    %6 = vector.shape_cast %5 : vector<48x16xf32> to vector<3x16x16xf32>
    %7 = vector.shape_cast %1 : vector<3x16x16xf32> to vector<48x16xf32>
    %cst_9 = arith.constant dense<0.000000e+00> : vector<48x16xf32>
    %8 = tpu.matmul %7, %3, %cst_9 {dimension_numbers = #tpu.dot_dimension_numbers<[1], [0], [0], [1], [0, 0, 1, 1], [], []>} : vector<48x16xf32>, vector<16x16xf32>, vector<48x16xf32> -> vector<48x16xf32>
    %9 = vector.shape_cast %8 : vector<48x16xf32> to vector<3x16x16xf32>
    %10 = arith.mulf %0, %0 : vector<3x16x16xf32>
    %11 = vector.shape_cast %10 : vector<3x16x16xf32> to vector<48x16xf32>
    %cst_10 = arith.constant dense<0.000000e+00> : vector<48x16xf32>
    %12 = tpu.matmul %11, %3, %cst_10 {dimension_numbers = #tpu.dot_dimension_numbers<[1], [0], [0], [1], [0, 0, 1, 1], [], []>} : vector<48x16xf32>, vector<16x16xf32>, vector<48x16xf32> -> vector<48x16xf32>
    %13 = vector.shape_cast %12 : vector<48x16xf32> to vector<3x16x16xf32>
    %14 = arith.mulf %1, %1 : vector<3x16x16xf32>
    %15 = vector.shape_cast %14 : vector<3x16x16xf32> to vector<48x16xf32>
    %cst_11 = arith.constant dense<0.000000e+00> : vector<48x16xf32>
    %16 = tpu.matmul %15, %3, %cst_11 {dimension_numbers = #tpu.dot_dimension_numbers<[1], [0], [0], [1], [0, 0, 1, 1], [], []>} : vector<48x16xf32>, vector<16x16xf32>, vector<48x16xf32> -> vector<48x16xf32>
    %17 = vector.shape_cast %16 : vector<48x16xf32> to vector<3x16x16xf32>
    %18 = arith.mulf %0, %1 : vector<3x16x16xf32>
    %19 = vector.shape_cast %18 : vector<3x16x16xf32> to vector<48x16xf32>
    %cst_12 = arith.constant dense<0.000000e+00> : vector<48x16xf32>
    %20 = tpu.matmul %19, %3, %cst_12 {dimension_numbers = #tpu.dot_dimension_numbers<[1], [0], [0], [1], [0, 0, 1, 1], [], []>} : vector<48x16xf32>, vector<16x16xf32>, vector<48x16xf32> -> vector<48x16xf32>
    %21 = vector.shape_cast %20 : vector<48x16xf32> to vector<3x16x16xf32>
    %cst_13 = arith.constant 0.000000e+00 : f32
    %22 = vector.broadcast %cst_13 : f32 to vector<16x16xf32>
    %23 = vector.extract_strided_slice %6 {offsets = [0, 0, 0], sizes = [1, 16, 16], strides = [1, 1, 1]} : vector<3x16x16xf32> to vector<1x16x16xf32>
    %24 = vector.shape_cast %23 : vector<1x16x16xf32> to vector<16x16xf32>
    %cst_14 = arith.constant dense<0.000000e+00> : vector<16x16xf32>
    %25 = tpu.matmul %2, %24, %cst_14 {dimension_numbers = #tpu.dot_dimension_numbers<[1], [0], [0], [1], [0, 0, 1, 1], [], []>} : vector<16x16xf32>, vector<16x16xf32>, vector<16x16xf32> -> vector<16x16xf32>
    %26 = vector.extract_strided_slice %9 {offsets = [0, 0, 0], sizes = [1, 16, 16], strides = [1, 1, 1]} : vector<3x16x16xf32> to vector<1x16x16xf32>
    %27 = vector.shape_cast %26 : vector<1x16x16xf32> to vector<16x16xf32>
    %cst_15 = arith.constant dense<0.000000e+00> : vector<16x16xf32>
    %28 = tpu.matmul %2, %27, %cst_15 {dimension_numbers = #tpu.dot_dimension_numbers<[1], [0], [0], [1], [0, 0, 1, 1], [], []>} : vector<16x16xf32>, vector<16x16xf32>, vector<16x16xf32> -> vector<16x16xf32>
    %29 = vector.extract_strided_slice %13 {offsets = [0, 0, 0], sizes = [1, 16, 16], strides = [1, 1, 1]} : vector<3x16x16xf32> to vector<1x16x16xf32>
    %30 = vector.shape_cast %29 : vector<1x16x16xf32> to vector<16x16xf32>
    %cst_16 = arith.constant dense<0.000000e+00> : vector<16x16xf32>
    %31 = tpu.matmul %2, %30, %cst_16 {dimension_numbers = #tpu.dot_dimension_numbers<[1], [0], [0], [1], [0, 0, 1, 1], [], []>} : vector<16x16xf32>, vector<16x16xf32>, vector<16x16xf32> -> vector<16x16xf32>
    %32 = vector.extract_strided_slice %17 {offsets = [0, 0, 0], sizes = [1, 16, 16], strides = [1, 1, 1]} : vector<3x16x16xf32> to vector<1x16x16xf32>
    %33 = vector.shape_cast %32 : vector<1x16x16xf32> to vector<16x16xf32>
    %cst_17 = arith.constant dense<0.000000e+00> : vector<16x16xf32>
    %34 = tpu.matmul %2, %33, %cst_17 {dimension_numbers = #tpu.dot_dimension_numbers<[1], [0], [0], [1], [0, 0, 1, 1], [], []>} : vector<16x16xf32>, vector<16x16xf32>, vector<16x16xf32> -> vector<16x16xf32>
    %35 = vector.extract_strided_slice %21 {offsets = [0, 0, 0], sizes = [1, 16, 16], strides = [1, 1, 1]} : vector<3x16x16xf32> to vector<1x16x16xf32>
    %36 = vector.shape_cast %35 : vector<1x16x16xf32> to vector<16x16xf32>
    %cst_18 = arith.constant dense<0.000000e+00> : vector<16x16xf32>
    %37 = tpu.matmul %2, %36, %cst_18 {dimension_numbers = #tpu.dot_dimension_numbers<[1], [0], [0], [1], [0, 0, 1, 1], [], []>} : vector<16x16xf32>, vector<16x16xf32>, vector<16x16xf32> -> vector<16x16xf32>
    %38 = arith.mulf %25, %25 : vector<16x16xf32>
    %39 = arith.mulf %28, %28 : vector<16x16xf32>
    %40 = arith.mulf %25, %28 : vector<16x16xf32>
    %41 = arith.subf %31, %38 : vector<16x16xf32>
    %42 = arith.subf %34, %39 : vector<16x16xf32>
    %43 = arith.subf %37, %40 : vector<16x16xf32>
    %cst_19 = arith.constant 2.000000e+00 : f32
    %44 = vector.broadcast %cst_19 : f32 to vector<16x16xf32>
    %45 = arith.mulf %44, %40 : vector<16x16xf32>
    %cst_20 = arith.constant 9.99999974E-5 : f32
    %46 = vector.broadcast %cst_20 : f32 to vector<16x16xf32>
    %47 = arith.addf %45, %46 : vector<16x16xf32>
    %cst_21 = arith.constant 2.000000e+00 : f32
    %48 = vector.broadcast %cst_21 : f32 to vector<16x16xf32>
    %49 = arith.mulf %48, %43 : vector<16x16xf32>
    %cst_22 = arith.constant 8.99999984E-4 : f32
    %50 = vector.broadcast %cst_22 : f32 to vector<16x16xf32>
    %51 = arith.addf %49, %50 : vector<16x16xf32>
    %52 = arith.mulf %47, %51 : vector<16x16xf32>
    %53 = arith.addf %38, %39 : vector<16x16xf32>
    %cst_23 = arith.constant 9.99999974E-5 : f32
    %54 = vector.broadcast %cst_23 : f32 to vector<16x16xf32>
    %55 = arith.addf %53, %54 : vector<16x16xf32>
    %56 = arith.addf %41, %42 : vector<16x16xf32>
    %cst_24 = arith.constant 8.99999984E-4 : f32
    %57 = vector.broadcast %cst_24 : f32 to vector<16x16xf32>
    %58 = arith.addf %56, %57 : vector<16x16xf32>
    %59 = arith.mulf %55, %58 : vector<16x16xf32>
    %60 = arith.divf %52, %59 : vector<16x16xf32>
    %61 = arith.addf %22, %60 : vector<16x16xf32>
    %62 = vector.extract_strided_slice %6 {offsets = [1, 0, 0], sizes = [1, 16, 16], strides = [1, 1, 1]} : vector<3x16x16xf32> to vector<1x16x16xf32>
    %63 = vector.shape_cast %62 : vector<1x16x16xf32> to vector<16x16xf32>
    %cst_25 = arith.constant dense<0.000000e+00> : vector<16x16xf32>
    %64 = tpu.matmul %2, %63, %cst_25 {dimension_numbers = #tpu.dot_dimension_numbers<[1], [0], [0], [1], [0, 0, 1, 1], [], []>} : vector<16x16xf32>, vector<16x16xf32>, vector<16x16xf32> -> vector<16x16xf32>
    %65 = vector.extract_strided_slice %9 {offsets = [1, 0, 0], sizes = [1, 16, 16], strides = [1, 1, 1]} : vector<3x16x16xf32> to vector<1x16x16xf32>
    %66 = vector.shape_cast %65 : vector<1x16x16xf32> to vector<16x16xf32>
    %cst_26 = arith.constant dense<0.000000e+00> : vector<16x16xf32>
    %67 = tpu.matmul %2, %66, %cst_26 {dimension_numbers = #tpu.dot_dimension_numbers<[1], [0], [0], [1], [0, 0, 1, 1], [], []>} : vector<16x16xf32>, vector<16x16xf32>, vector<16x16xf32> -> vector<16x16xf32>
    %68 = vector.extract_strided_slice %13 {offsets = [1, 0, 0], sizes = [1, 16, 16], strides = [1, 1, 1]} : vector<3x16x16xf32> to vector<1x16x16xf32>
    %69 = vector.shape_cast %68 : vector<1x16x16xf32> to vector<16x16xf32>
    %cst_27 = arith.constant dense<0.000000e+00> : vector<16x16xf32>
    %70 = tpu.matmul %2, %69, %cst_27 {dimension_numbers = #tpu.dot_dimension_numbers<[1], [0], [0], [1], [0, 0, 1, 1], [], []>} : vector<16x16xf32>, vector<16x16xf32>, vector<16x16xf32> -> vector<16x16xf32>
    %71 = vector.extract_strided_slice %17 {offsets = [1, 0, 0], sizes = [1, 16, 16], strides = [1, 1, 1]} : vector<3x16x16xf32> to vector<1x16x16xf32>
    %72 = vector.shape_cast %71 : vector<1x16x16xf32> to vector<16x16xf32>
    %cst_28 = arith.constant dense<0.000000e+00> : vector<16x16xf32>
    %73 = tpu.matmul %2, %72, %cst_28 {dimension_numbers = #tpu.dot_dimension_numbers<[1], [0], [0], [1], [0, 0, 1, 1], [], []>} : vector<16x16xf32>, vector<16x16xf32>, vector<16x16xf32> -> vector<16x16xf32>
    %74 = vector.extract_strided_slice %21 {offsets = [1, 0, 0], sizes = [1, 16, 16], strides = [1, 1, 1]} : vector<3x16x16xf32> to vector<1x16x16xf32>
    %75 = vector.shape_cast %74 : vector<1x16x16xf32> to vector<16x16xf32>
    %cst_29 = arith.constant dense<0.000000e+00> : vector<16x16xf32>
    %76 = tpu.matmul %2, %75, %cst_29 {dimension_numbers = #tpu.dot_dimension_numbers<[1], [0], [0], [1], [0, 0, 1, 1], [], []>} : vector<16x16xf32>, vector<16x16xf32>, vector<16x16xf32> -> vector<16x16xf32>
    %77 = arith.mulf %64, %64 : vector<16x16xf32>
    %78 = arith.mulf %67, %67 : vector<16x16xf32>
    %79 = arith.mulf %64, %67 : vector<16x16xf32>
    %80 = arith.subf %70, %77 : vector<16x16xf32>
    %81 = arith.subf %73, %78 : vector<16x16xf32>
    %82 = arith.subf %76, %79 : vector<16x16xf32>
    %cst_30 = arith.constant 2.000000e+00 : f32
    %83 = vector.broadcast %cst_30 : f32 to vector<16x16xf32>
    %84 = arith.mulf %83, %79 : vector<16x16xf32>
    %cst_31 = arith.constant 9.99999974E-5 : f32
    %85 = vector.broadcast %cst_31 : f32 to vector<16x16xf32>
    %86 = arith.addf %84, %85 : vector<16x16xf32>
    %cst_32 = arith.constant 2.000000e+00 : f32
    %87 = vector.broadcast %cst_32 : f32 to vector<16x16xf32>
    %88 = arith.mulf %87, %82 : vector<16x16xf32>
    %cst_33 = arith.constant 8.99999984E-4 : f32
    %89 = vector.broadcast %cst_33 : f32 to vector<16x16xf32>
    %90 = arith.addf %88, %89 : vector<16x16xf32>
    %91 = arith.mulf %86, %90 : vector<16x16xf32>
    %92 = arith.addf %77, %78 : vector<16x16xf32>
    %cst_34 = arith.constant 9.99999974E-5 : f32
    %93 = vector.broadcast %cst_34 : f32 to vector<16x16xf32>
    %94 = arith.addf %92, %93 : vector<16x16xf32>
    %95 = arith.addf %80, %81 : vector<16x16xf32>
    %cst_35 = arith.constant 8.99999984E-4 : f32
    %96 = vector.broadcast %cst_35 : f32 to vector<16x16xf32>
    %97 = arith.addf %95, %96 : vector<16x16xf32>
    %98 = arith.mulf %94, %97 : vector<16x16xf32>
    %99 = arith.divf %91, %98 : vector<16x16xf32>
    %100 = arith.addf %61, %99 : vector<16x16xf32>
    %101 = vector.extract_strided_slice %6 {offsets = [2, 0, 0], sizes = [1, 16, 16], strides = [1, 1, 1]} : vector<3x16x16xf32> to vector<1x16x16xf32>
    %102 = vector.shape_cast %101 : vector<1x16x16xf32> to vector<16x16xf32>
    %cst_36 = arith.constant dense<0.000000e+00> : vector<16x16xf32>
    %103 = tpu.matmul %2, %102, %cst_36 {dimension_numbers = #tpu.dot_dimension_numbers<[1], [0], [0], [1], [0, 0, 1, 1], [], []>} : vector<16x16xf32>, vector<16x16xf32>, vector<16x16xf32> -> vector<16x16xf32>
    %104 = vector.extract_strided_slice %9 {offsets = [2, 0, 0], sizes = [1, 16, 16], strides = [1, 1, 1]} : vector<3x16x16xf32> to vector<1x16x16xf32>
    %105 = vector.shape_cast %104 : vector<1x16x16xf32> to vector<16x16xf32>
    %cst_37 = arith.constant dense<0.000000e+00> : vector<16x16xf32>
    %106 = tpu.matmul %2, %105, %cst_37 {dimension_numbers = #tpu.dot_dimension_numbers<[1], [0], [0], [1], [0, 0, 1, 1], [], []>} : vector<16x16xf32>, vector<16x16xf32>, vector<16x16xf32> -> vector<16x16xf32>
    %107 = vector.extract_strided_slice %13 {offsets = [2, 0, 0], sizes = [1, 16, 16], strides = [1, 1, 1]} : vector<3x16x16xf32> to vector<1x16x16xf32>
    %108 = vector.shape_cast %107 : vector<1x16x16xf32> to vector<16x16xf32>
    %cst_38 = arith.constant dense<0.000000e+00> : vector<16x16xf32>
    %109 = tpu.matmul %2, %108, %cst_38 {dimension_numbers = #tpu.dot_dimension_numbers<[1], [0], [0], [1], [0, 0, 1, 1], [], []>} : vector<16x16xf32>, vector<16x16xf32>, vector<16x16xf32> -> vector<16x16xf32>
    %110 = vector.extract_strided_slice %17 {offsets = [2, 0, 0], sizes = [1, 16, 16], strides = [1, 1, 1]} : vector<3x16x16xf32> to vector<1x16x16xf32>
    %111 = vector.shape_cast %110 : vector<1x16x16xf32> to vector<16x16xf32>
    %cst_39 = arith.constant dense<0.000000e+00> : vector<16x16xf32>
    %112 = tpu.matmul %2, %111, %cst_39 {dimension_numbers = #tpu.dot_dimension_numbers<[1], [0], [0], [1], [0, 0, 1, 1], [], []>} : vector<16x16xf32>, vector<16x16xf32>, vector<16x16xf32> -> vector<16x16xf32>
    %113 = vector.extract_strided_slice %21 {offsets = [2, 0, 0], sizes = [1, 16, 16], strides = [1, 1, 1]} : vector<3x16x16xf32> to vector<1x16x16xf32>
    %114 = vector.shape_cast %113 : vector<1x16x16xf32> to vector<16x16xf32>
    %cst_40 = arith.constant dense<0.000000e+00> : vector<16x16xf32>
    %115 = tpu.matmul %2, %114, %cst_40 {dimension_numbers = #tpu.dot_dimension_numbers<[1], [0], [0], [1], [0, 0, 1, 1], [], []>} : vector<16x16xf32>, vector<16x16xf32>, vector<16x16xf32> -> vector<16x16xf32>
    %116 = arith.mulf %103, %103 : vector<16x16xf32>
    %117 = arith.mulf %106, %106 : vector<16x16xf32>
    %118 = arith.mulf %103, %106 : vector<16x16xf32>
    %119 = arith.subf %109, %116 : vector<16x16xf32>
    %120 = arith.subf %112, %117 : vector<16x16xf32>
    %121 = arith.subf %115, %118 : vector<16x16xf32>
    %cst_41 = arith.constant 2.000000e+00 : f32
    %122 = vector.broadcast %cst_41 : f32 to vector<16x16xf32>
    %123 = arith.mulf %122, %118 : vector<16x16xf32>
    %cst_42 = arith.constant 9.99999974E-5 : f32
    %124 = vector.broadcast %cst_42 : f32 to vector<16x16xf32>
    %125 = arith.addf %123, %124 : vector<16x16xf32>
    %cst_43 = arith.constant 2.000000e+00 : f32
    %126 = vector.broadcast %cst_43 : f32 to vector<16x16xf32>
    %127 = arith.mulf %126, %121 : vector<16x16xf32>
    %cst_44 = arith.constant 8.99999984E-4 : f32
    %128 = vector.broadcast %cst_44 : f32 to vector<16x16xf32>
    %129 = arith.addf %127, %128 : vector<16x16xf32>
    %130 = arith.mulf %125, %129 : vector<16x16xf32>
    %131 = arith.addf %116, %117 : vector<16x16xf32>
    %cst_45 = arith.constant 9.99999974E-5 : f32
    %132 = vector.broadcast %cst_45 : f32 to vector<16x16xf32>
    %133 = arith.addf %131, %132 : vector<16x16xf32>
    %134 = arith.addf %119, %120 : vector<16x16xf32>
    %cst_46 = arith.constant 8.99999984E-4 : f32
    %135 = vector.broadcast %cst_46 : f32 to vector<16x16xf32>
    %136 = arith.addf %134, %135 : vector<16x16xf32>
    %137 = arith.mulf %133, %136 : vector<16x16xf32>
    %138 = arith.divf %130, %137 : vector<16x16xf32>
    %139 = arith.addf %100, %138 : vector<16x16xf32>
    %140 = vector.shape_cast %139 : vector<16x16xf32> to vector<1x16x16xf32>
    %cst_47 = arith.constant dense<0.000000e+00> : vector<1xf32>
    %141 = vector.multi_reduction <add>, %140, %cst_47 [1, 2] : vector<1x16x16xf32> to vector<1xf32>
    %142 = vector.shape_cast %141 : vector<1xf32> to vector<1x1x1xf32>
    %143 = vector.extract %142[0, 0, 0] : f32 from vector<1x1x1xf32>
    %144 = tpu.iota {dimensions = array<i32: 0>} : vector<8x128xi32>
    %145 = tpu.iota {dimensions = array<i32: 1>} : vector<8x128xi32>
    %c0_i32 = arith.constant 0 : i32
    %146 = vector.broadcast %c0_i32 : i32 to vector<8x128xi32>
    %147 = arith.cmpi eq, %144, %146 : vector<8x128xi32>
    %c0_i32_48 = arith.constant 0 : i32
    %148 = vector.broadcast %c0_i32_48 : i32 to vector<8x128xi32>
    %149 = arith.cmpi eq, %145, %148 : vector<8x128xi32>
    %150 = arith.andi %147, %149 : vector<8x128xi1>
    %cst_49 = arith.constant 0.000000e+00 : f32
    %151 = vector.broadcast %143 : f32 to vector<8x128xf32>
    %152 = vector.broadcast %cst_49 : f32 to vector<8x128xf32>
    %153 = arith.select %150, %151, %152 : vector<8x128xi1>, vector<8x128xf32>
    %154 = vector.shape_cast %153 : vector<8x128xf32> to vector<1x8x128xf32>
    %c0_50 = arith.constant 0 : index
    %c0_51 = arith.constant 0 : index
    %c0_52 = arith.constant 0 : index
    %155 = vector.load %arg5[%c0_50, %c0_51, %c0_52] : memref<1x8x128xf32, #tpu.memory_space<vmem>>, vector<1x8x128xf32>
    tpu.vector_store %arg5[%c0_50, %c0_51, %c0_52], %154 {strides = array<i32>} : memref<1x8x128xf32, #tpu.memory_space<vmem>>, vector<1x8x128xf32>,
    return
  }
  func.func @transform_0(%arg0: i32) -> (i32, i32, i32) {
    %c0_i32 = arith.constant 0 : i32
    %c0_i32_0 = arith.constant 0 : i32
    %c0_i32_1 = arith.constant 0 : i32
    return %arg0, %c0_i32, %c0_i32_0 : i32, i32, i32
  }
  func.func @transform_1(%arg0: i32) -> (i32, i32, i32) {
    %c0_i32 = arith.constant 0 : i32
    %c0_i32_0 = arith.constant 0 : i32
    %c0_i32_1 = arith.constant 0 : i32
    return %arg0, %c0_i32, %c0_i32_0 : i32, i32, i32
  }
  func.func @transform_2(%arg0: i32) -> (i32, i32) {
    %c0_i32 = arith.constant 0 : i32
    %c0_i32_0 = arith.constant 0 : i32
    %c0_i32_1 = arith.constant 0 : i32
    return %c0_i32, %c0_i32_0 : i32, i32
  }
  func.func @transform_3(%arg0: i32) -> (i32, i32) {
    %c0_i32 = arith.constant 0 : i32
    %c0_i32_0 = arith.constant 0 : i32
    %c0_i32_1 = arith.constant 0 : i32
    return %c0_i32, %c0_i32_0 : i32, i32
  }
  func.func @transform_4(%arg0: i32) -> (i32, i32, i32) {
    %c0_i32 = arith.constant 0 : i32
    %c0_i32_0 = arith.constant 0 : i32
    %c0_i32_1 = arith.constant 0 : i32
    return %arg0, %c0_i32, %c0_i32_0 : i32, i32, i32
  }
}

</mosaic_0001>

<llo_original>
// kernel: tpu_custom_call.1
$region0: #{tpu_custom_call.1}
  #allocation0 [shape = 'u32[]', space=smem, size = 0x4, offset = 0x4, fixed_abs, tag = 'smem constant byte address 0x4 - core index']
  #allocation1 [shape = 'u32[144,128]{1,0:T(1,128)}', space=vmem, size = 0x12000, scoped, tag = 'internal scratch']
  %s0 = inlined_call_operand.hbm [shape: f32[6,16,16], index: 0, kind: input, shape index: {}]
  %s1 = inlined_call_operand.hbm [shape: f32[6,16,16], index: 1, kind: input, shape index: {}]
  %s2 = inlined_call_operand.hbm [shape: f32[16,16], index: 2, kind: input, shape index: {}]
  %s3 = inlined_call_operand.hbm [shape: f32[16,16], index: 3, kind: input, shape index: {}]
  %s4 = inlined_call_operand.hbm [shape: f32[2,8,128], index: 4, kind: output, shape index: {}]
  %s5 = sld [smem:[#allocation0]]
  $region65: #{tpu_custom_call.1} parent=0
    _
  %s7 = ssub.s32 1, %s5
  %s8 = scalar_select 0, %s7, %s5
  $region1: #{tpu_custom_call.1} parent=0
    #allocation2 [shape = 'u8[49152]{0}', space=vmem, size = 0xc000, scoped, tag = 'input window, operand 0']
    #allocation3 [shape = 's32[2]{0}', space=sflag, size = 0x8, scoped, tag = 'scoped memory for tpu_custom_call.1']
    #allocation4 [shape = 's32[2]{0}', space=sflag, size = 0x8, scoped, tag = 'scoped memory for tpu_custom_call.1']
    #allocation5 [shape = 'u8[49152]{0}', space=vmem, size = 0xc000, scoped, tag = 'input window, operand 1']
    #allocation6 [shape = 's32[2]{0}', space=sflag, size = 0x8, scoped, tag = 'scoped memory for tpu_custom_call.1']
    #allocation7 [shape = 'u8[8192]{0}', space=vmem, size = 0x2000, scoped, tag = 'input window, operand 2, single buffered']
    #allocation8 [shape = 'u8[8192]{0}', space=vmem, size = 0x2000, scoped, tag = 'input window, operand 3, single buffered']
    #allocation9 [shape = 's32[1]{0}', space=sflag, size = 0x4, scoped, tag = 'scoped memory for tpu_custom_call.1']
    #allocation10 [shape = 'u8[8192]{0}', space=vmem, size = 0x2000, scoped, tag = 'output window, operand 0']
    %9 = vsyncpa [#allocation3], 0
    %s10 = scalar_lea.sflag [#allocation3], 1
    %11 = vsyncpa %s10, 0
    %12 = vsyncpa [#allocation6], 0
    %s13 = scalar_lea.sflag [#allocation6], 1
    %14 = vsyncpa %s13, 0
    %15 = vsyncpa [#allocation9], 0
    %16 = vsyncpa [#allocation4], 0
    %s17 = scalar_lea.sflag [#allocation4], 1
    %18 = vsyncpa %s17, 0
    loop: start=0, step=1, limit=4
    $region2: #{tpu_custom_call.1} parent=1 // loop_pre_header
      _
    $region3: #{tpu_custom_call.1} parent=1 // loop_header
      %s20 = sphi 0, %s24
      %p21 = scmp.ge.s32.totalorder %s20, 4
      %s30 = sphi 0, %s32
      %s33 = sphi 0, %s30
      %s34 = sphi 0, %s33
      %s50 = sphi 0, %s34
      %s56 = sphi 0, %s58
      %s59 = sphi 0, %s56
      %s60 = sphi 0, %s59
      %s76 = sphi 0, %s60
      %s80 = sphi 0, %s80
      %s82 = sphi 0, %s80
      %s83 = sphi 0, %s82
      %s97 = sphi 0, %s83
      %s101 = sphi 0, %s101
      %s103 = sphi 0, %s101
      %s104 = sphi 0, %s103
      %s118 = sphi 0, %s104
      %s124 = sphi 0, %s126
      %s127 = sphi 0, %s124
      %s128 = sphi 0, %s127
      %s144 = sphi 0, %s128
    $region4: #{tpu_custom_call.1} parent=1 // loop_header_branch
      %23 = sbr.rel (%p21) target = $region8
    $region5: #{tpu_custom_call.1} parent=1 // loop_body
      %s25 = ssub.s32 %s20, 1
      %s26 = ssub.s32 %s20, 2
      %s27 = sadd.s32 %s20, 1
      %s28 = ssub.s32 %s20, %s27
      %p29 = scmp.eq.s32.totalorder %s28, 0
      %s31 = sadd.s32 %s30, 1
      %s32 = scalar_select %p29, %s30, %s31
      %p35 = pneg %p29
      %p36 = scmp.eq.s32.totalorder %s20, 1
      %p37 = por %p35, %p36
      %p38 = scmp.ne.s32.totalorder %s30, %s33
      %p39 = scmp.eq.s32.totalorder %s20, 0
      %p40 = por %p38, %p39
      %p41 = scmp.ne.s32.totalorder %s30, %s33
      %p42 = scmp.eq.s32.totalorder %s25, 1
      %p43 = por %p41, %p42
      %p44 = scmp.ne.s32.totalorder %s33, %s34
      %p45 = scmp.eq.s32.totalorder %s25, 0
      %p46 = por %p44, %p45
      %p47 = scmp.ne.s32.totalorder %s33, %s34
      %p48 = scmp.eq.s32.totalorder %s26, 1
      %p49 = por %p47, %p48
      %p51 = scmp.ne.s32.totalorder %s34, %s50
      %p52 = scmp.eq.s32.totalorder %s26, 0
      %p53 = por %p51, %p52
      %s54 = ssub.s32 %s20, %s27
      %p55 = scmp.eq.s32.totalorder %s54, 0
      %s57 = sadd.s32 %s56, 1
      %s58 = scalar_select %p55, %s56, %s57
      %p61 = pneg %p55
      %p62 = scmp.eq.s32.totalorder %s20, 1
      %p63 = por %p61, %p62
      %p64 = scmp.ne.s32.totalorder %s56, %s59
      %p65 = scmp.eq.s32.totalorder %s20, 0
      %p66 = por %p64, %p65
      %p67 = scmp.ne.s32.totalorder %s56, %s59
      %p68 = scmp.eq.s32.totalorder %s25, 1
      %p69 = por %p67, %p68
      %p70 = scmp.ne.s32.totalorder %s59, %s60
      %p71 = scmp.eq.s32.totalorder %s25, 0
      %p72 = por %p70, %p71
      %p73 = scmp.ne.s32.totalorder %s59, %s60
      %p74 = scmp.eq.s32.totalorder %s26, 1
      %p75 = por %p73, %p74
      %p77 = scmp.ne.s32.totalorder %s60, %s76
      %p78 = scmp.eq.s32.totalorder %s26, 0
      %p79 = por %p77, %p78
      %s81 = sadd.s32 %s80, 1
      %p84 = scmp.eq.s32.totalorder %s20, 1
      %p85 = scmp.ne.s32.totalorder %s80, %s82
      %p86 = scmp.eq.s32.totalorder %s20, 0
      %p87 = por %p85, %p86
      %p88 = scmp.ne.s32.totalorder %s80, %s82
      %p89 = scmp.eq.s32.totalorder %s25, 1
      %p90 = por %p88, %p89
      %p91 = scmp.ne.s32.totalorder %s82, %s83
      %p92 = scmp.eq.s32.totalorder %s25, 0
      %p93 = por %p91, %p92
      %p94 = scmp.ne.s32.totalorder %s82, %s83
      %p95 = scmp.eq.s32.totalorder %s26, 1
      %p96 = por %p94, %p95
      %p98 = scmp.ne.s32.totalorder %s83, %s97
      %p99 = scmp.eq.s32.totalorder %s26, 0
      %p100 = por %p98, %p99
      %s102 = sadd.s32 %s101, 1
      %p105 = scmp.eq.s32.totalorder %s20, 1
      %p106 = scmp.ne.s32.totalorder %s101, %s103
      %p107 = scmp.eq.s32.totalorder %s20, 0
      %p108 = por %p106, %p107
      %p109 = scmp.ne.s32.totalorder %s101, %s103
      %p110 = scmp.eq.s32.totalorder %s25, 1
      %p111 = por %p109, %p110
      %p112 = scmp.ne.s32.totalorder %s103, %s104
      %p113 = scmp.eq.s32.totalorder %s25, 0
      %p114 = por %p112, %p113
      %p115 = scmp.ne.s32.totalorder %s103, %s104
      %p116 = scmp.eq.s32.totalorder %s26, 1
      %p117 = por %p115, %p116
      %p119 = scmp.ne.s32.totalorder %s104, %s118
      %p120 = scmp.eq.s32.totalorder %s26, 0
      %p121 = por %p119, %p120
      %s122 = ssub.s32 %s20, %s27
      %p123 = scmp.eq.s32.totalorder %s122, 0
      %s125 = sadd.s32 %s124, 1
      %s126 = scalar_select %p123, %s124, %s125
      %p129 = pneg %p123
      %p130 = scmp.eq.s32.totalorder %s20, 1
      %p131 = por %p129, %p130
      %p132 = scmp.ne.s32.totalorder %s124, %s127
      %p133 = scmp.eq.s32.totalorder %s20, 0
      %p134 = por %p132, %p133
      %p135 = scmp.ne.s32.totalorder %s124, %s127
      %p136 = scmp.eq.s32.totalorder %s25, 1
      %p137 = por %p135, %p136
      %p138 = scmp.ne.s32.totalorder %s127, %s128
      %p139 = scmp.eq.s32.totalorder %s25, 0
      %p140 = por %p138, %p139
      %p141 = scmp.ne.s32.totalorder %s127, %s128
      %p142 = scmp.eq.s32.totalorder %s26, 1
      %p143 = por %p141, %p142
      %p145 = scmp.ne.s32.totalorder %s128, %s144
      %p146 = scmp.eq.s32.totalorder %s26, 0
      %p147 = por %p145, %p146
      %p148 = scmp.le.s32.totalorder 1, %s20
      %p149 = scmp.lt.s32.totalorder %s20, 3
      %p150 = pnand %p148, %p149
      %p151 = pneg %p150
      // Predicated region
      $region9: #{tpu_custom_call.1} parent=5 // pred_check
        _
      $region10: #{tpu_custom_call.1} parent=5 // pred_check_branch
        %153 = sbr.rel (%p150) target = $region12
      $region11: #{tpu_custom_call.1} parent=5 // pred_region
        %s154 = ssub.s32 %s20, 1
        // Predicated region
        $region13: #{tpu_custom_call.1} parent=11 // pred_check
          %p155 = pneg %p93
        $region14: #{tpu_custom_call.1} parent=11 // pred_check_branch
          %157 = sbr.rel (%p155) target = $region16
        $region15: #{tpu_custom_call.1} parent=11 // pred_region
          %s159 = ssub.s32 256, 256
          %160 = vsyncadd [#allocation6], %s159
          %s161 = sshll.u32 [#allocation7], 4
          %s162 = int_to_ptr.vmem [resolvable:$true] %s161
          %167 = dma.hbm_to_vmem [thread:$0]  %s2, 256, %s162, [#allocation6], 128, 128, 8
        $region16: #{tpu_custom_call.1} parent=11 // pred_fallthru
          _
        // Predicated region
        $region17: #{tpu_custom_call.1} parent=11 // pred_check
          %p168 = pneg %p114
        $region18: #{tpu_custom_call.1} parent=11 // pred_check_branch
          %170 = sbr.rel (%p168) target = $region20
        $region19: #{tpu_custom_call.1} parent=11 // pred_region
          %s172 = ssub.s32 256, 256
          %173 = vsyncadd [#allocation9], %s172
          %s174 = sshll.u32 [#allocation8], 4
          %s175 = int_to_ptr.vmem [resolvable:$true] %s174
          %180 = dma.hbm_to_vmem [thread:$0]  %s3, 256, %s175, [#allocation9], 128, 128, 8
        $region20: #{tpu_custom_call.1} parent=11 // pred_fallthru
          _
      $region12: #{tpu_custom_call.1} parent=5 // pred_fallthru
        _
      %p181 = scmp.lt.s32.totalorder %s20, 2
      // Predicated region
      $region21: #{tpu_custom_call.1} parent=5 // pred_check
        %p182 = pneg %p181
      $region22: #{tpu_custom_call.1} parent=5 // pred_check_branch
        %184 = sbr.rel (%p182) target = $region24
      $region23: #{tpu_custom_call.1} parent=5 // pred_region
        // Predicated region
        $region25: #{tpu_custom_call.1} parent=23 // pred_check
          %p185 = pneg %p40
        $region26: #{tpu_custom_call.1} parent=23 // pred_check_branch
          %187 = sbr.rel (%p185) target = $region28
        $region27: #{tpu_custom_call.1} parent=23 // pred_region
          %s188 = sand.u32 %s30, 1
          %s189 = scalar_lea.sflag [#allocation3], %s188
          %s190 = sand.u32 %s30, 1
          %s191 = smul.addr %s190, 48
          %s192 = scalar_lea.vmem [#allocation2], %s191
          %s193 = smul.u32 3, %s20
          %s195 = ssub.s32 768, 768
          %196 = vsyncadd %s189, %s195
          %s197 = smul.addr %s193, 2
          %s198 = smul.addr %s197, 128
          %s199 = scalar_lea.hbm %s0, %s198
          %s200 = sshll.u32 %s192, 4
          %s201 = int_to_ptr.vmem [resolvable:$true] %s200
          %206 = dma.hbm_to_vmem [thread:$0]  %s199, 768, %s201, %s189, 128, 128, 8
        $region28: #{tpu_custom_call.1} parent=23 // pred_fallthru
          _
        // Predicated region
        $region29: #{tpu_custom_call.1} parent=23 // pred_check
          %p207 = pneg %p66
        $region30: #{tpu_custom_call.1} parent=23 // pred_check_branch
          %209 = sbr.rel (%p207) target = $region32
        $region31: #{tpu_custom_call.1} parent=23 // pred_region
          %s210 = sand.u32 %s20, 1
          %s211 = scalar_lea.sflag [#allocation6], %s210
          %s212 = sand.u32 %s56, 1
          %s213 = smul.addr %s212, 48
          %s214 = scalar_lea.vmem [#allocation5], %s213
          %s215 = smul.u32 3, %s20
          %s217 = ssub.s32 768, 768
          %218 = vsyncadd %s211, %s217
          %s219 = smul.addr %s215, 2
          %s220 = smul.addr %s219, 128
          %s221 = scalar_lea.hbm %s1, %s220
          %s222 = sshll.u32 %s214, 4
          %s223 = int_to_ptr.vmem [resolvable:$true] %s222
          %228 = dma.hbm_to_vmem [thread:$0]  %s221, 768, %s223, %s211, 128, 128, 8
        $region32: #{tpu_custom_call.1} parent=23 // pred_fallthru
          _
      $region24: #{tpu_custom_call.1} parent=5 // pred_fallthru
        _
      %p229 = scmp.le.s32.totalorder 1, %s20
      %p230 = scmp.lt.s32.totalorder %s20, 3
      %p231 = pnand %p229, %p230
      %p232 = pneg %p231
      // Predicated region
      $region33: #{tpu_custom_call.1} parent=5 // pred_check
        _
      $region34: #{tpu_custom_call.1} parent=5 // pred_check_branch
        %234 = sbr.rel (%p231) target = $region36
      $region35: #{tpu_custom_call.1} parent=5 // pred_region
        %s235 = ssub.s32 %s20, 1
        %s236 = sand.u32 %s33, 1
        %s237 = scalar_lea.sflag [#allocation3], %s236
        %s238 = sand.u32 %s33, 1
        %s239 = smul.addr %s238, 48
        %s240 = scalar_lea.vmem [#allocation2], %s239
        // Predicated region
        $region37: #{tpu_custom_call.1} parent=35 // pred_check
          %p241 = pneg %p46
        $region38: #{tpu_custom_call.1} parent=35 // pred_check_branch
          %243 = sbr.rel (%p241) target = $region40
        $region39: #{tpu_custom_call.1} parent=35 // pred_region
          %244 = dma.done %s237, 768
        $region40: #{tpu_custom_call.1} parent=35 // pred_fallthru
          _
        %s245 = sand.u32 %s25, 1
        %s246 = scalar_lea.sflag [#allocation6], %s245
        %s247 = sand.u32 %s59, 1
        %s248 = smul.addr %s247, 48
        %s249 = scalar_lea.vmem [#allocation5], %s248
        // Predicated region
        $region41: #{tpu_custom_call.1} parent=35 // pred_check
          %p250 = pneg %p72
        $region42: #{tpu_custom_call.1} parent=35 // pred_check_branch
          %252 = sbr.rel (%p250) target = $region44
        $region43: #{tpu_custom_call.1} parent=35 // pred_region
          %253 = dma.done %s246, 768
        $region44: #{tpu_custom_call.1} parent=35 // pred_fallthru
          _
        // Predicated region
        $region45: #{tpu_custom_call.1} parent=35 // pred_check
          %p254 = pneg %p93
        $region46: #{tpu_custom_call.1} parent=35 // pred_check_branch
          %256 = sbr.rel (%p254) target = $region48
        $region47: #{tpu_custom_call.1} parent=35 // pred_region
          %257 = dma.done [#allocation6], 256
        $region48: #{tpu_custom_call.1} parent=35 // pred_fallthru
          _
        // Predicated region
        $region49: #{tpu_custom_call.1} parent=35 // pred_check
          %p258 = pneg %p114
        $region50: #{tpu_custom_call.1} parent=35 // pred_check_branch
          %260 = sbr.rel (%p258) target = $region52
        $region51: #{tpu_custom_call.1} parent=35 // pred_region
          %261 = dma.done [#allocation9], 256
        $region52: #{tpu_custom_call.1} parent=35 // pred_fallthru
          _
        %s262 = sand.u32 %s33, 1
        %s263 = scalar_lea.sflag [#allocation3], %s262
        %s264 = sand.u32 %s33, 1
        %s265 = smul.addr %s264, 48
        %s266 = scalar_lea.vmem [#allocation2], %s265
        %p267 = pneg %p46
        %p268 = pneg %p43
        %s269 = sand.u32 %s25, 1
        %s270 = scalar_lea.sflag [#allocation6], %s269
        %s271 = sand.u32 %s59, 1
        %s272 = smul.addr %s271, 48
        %s273 = scalar_lea.vmem [#allocation5], %s272
        %p274 = pneg %p72
        %p275 = pneg %p69
        %p276 = pneg %p93
        %p277 = pneg %p90
        %p278 = pneg %p114
        %p279 = pneg %p111
        %p280 = pneg %p140
        %p281 = pneg %p137
        %s282 = sand.u32 %s127, 1
        %s283 = scalar_lea.sflag [#allocation4], %s282
        %s284 = sand.u32 %s127, 1
        %s285 = smul.addr %s284, 8
        %s286 = scalar_lea.vmem [#allocation10], %s285
        %s287 = smul.u32 3, %s25
        %s288 = smul.u32 3, %s25
        %v289 = vld [vmem:[%s240] sm:$0xff]
        %v290 = vld [vmem:[%s240 + $0x8] sm:$0xff]
        %v291 = vld [vmem:[%s240 + $0x10] sm:$0xff]
        %v292 = vld [vmem:[%s240 + $0x18] sm:$0xff]
        %v293 = vld [vmem:[%s240 + $0x20] sm:$0xff]
        %v294 = vld [vmem:[%s240 + $0x28] sm:$0xff]
        %v295 = vld [vmem:[%s249] sm:$0xff]
        %v296 = vld [vmem:[%s249 + $0x8] sm:$0xff]
        %v297 = vld [vmem:[%s249 + $0x10] sm:$0xff]
        %v298 = vld [vmem:[%s249 + $0x18] sm:$0xff]
        %v299 = vld [vmem:[%s249 + $0x20] sm:$0xff]
        %v300 = vld [vmem:[%s249 + $0x28] sm:$0xff]
        %v301 = vld [vmem:[#allocation7] sm:$0xff]
        %v302 = vld [vmem:[#allocation7 + $0x8] sm:$0xff]
        %v303 = vld [vmem:[#allocation8] sm:$0xff]
        %v304 = vld [vmem:[#allocation8 + $0x8] sm:$0xff]
        %vm305 = vcmask 130048
        %v307 = vsel %vm305, %v289, 0
        %v310 = vsel %vm305, %v290, 0
        %v313 = vsel %vm305, %v291, 0
        %v316 = vsel %vm305, %v292, 0
        %v319 = vsel %vm305, %v293, 0
        %v322 = vsel %vm305, %v294, 0
        %324 = vmatprep.subr.mxu0 0.0
        %325 = vmatpush1.msra.mxu0 0.0
        %326 = vmatprep.subr.mxu0 0.0
        %327 = vmatpush1.msra.mxu0 0.0
        %328 = vmatprep.subr.mxu0 0.0
        %329 = vmatpush1.msra.mxu0 0.0
        %330 = vmatprep.subr.mxu0 0.0
        %331 = vmatpush1.msra.mxu0 0.0
        %332 = vmatprep.subr.mxu0 0.0
        %333 = vmatpush1.msra.mxu0 0.0
        %334 = vmatprep.subr.mxu0 0.0
        %335 = vmatpush1.msra.mxu0 0.0
        %336 = vmatprep.subr.mxu0 0.0
        %337 = vmatpush1.msra.mxu0 0.0
        %338 = vmatprep.subr.mxu0 0.0
        %339 = vmatpush1.msra.mxu0 0.0
        %340 = vmatprep.subr.mxu0 0.0
        %341 = vmatpush1.msra.mxu0 0.0
        %342 = vmatprep.subr.mxu0 0.0
        %343 = vmatpush1.msra.mxu0 0.0
        %344 = vmatprep.subr.mxu0 0.0
        %345 = vmatpush1.msra.mxu0 0.0
        %346 = vmatprep.subr.mxu0 0.0
        %347 = vmatpush1.msra.mxu0 0.0
        %348 = vmatprep.subr.mxu0 0.0
        %349 = vmatpush1.msra.mxu0 0.0
        %350 = vmatprep.subr.mxu0 0.0
        %351 = vmatpush1.msra.mxu0 0.0
        %352 = vmatprep.subr.mxu0 0.0
        %353 = vmatpush1.msra.mxu0 %v304
        %354 = vmatprep.subr.mxu0 0.0
        %355 = vmatpush1.msra.mxu0 %v303
        %356 = vmatprep.subr.mxu0 0.0
        %357 = vmatpush2.msra.mxu0 0.0
        %358 = vmatprep.subr.mxu0 0.0
        %359 = vmatpush2.msra.mxu0 0.0
        %360 = vmatprep.subr.mxu0 0.0
        %361 = vmatpush2.msra.mxu0 0.0
        %362 = vmatprep.subr.mxu0 0.0
        %363 = vmatpush2.msra.mxu0 0.0
        %364 = vmatprep.subr.mxu0 0.0
        %365 = vmatpush2.msra.mxu0 0.0
        %366 = vmatprep.subr.mxu0 0.0
        %367 = vmatpush2.msra.mxu0 0.0
        %368 = vmatprep.subr.mxu0 0.0
        %369 = vmatpush2.msra.mxu0 0.0
        %370 = vmatprep.subr.mxu0 0.0
        %371 = vmatpush2.msra.mxu0 0.0
        %372 = vmatprep.subr.mxu0 0.0
        %373 = vmatpush2.msra.mxu0 0.0
        %374 = vmatprep.subr.mxu0 0.0
        %375 = vmatpush2.msra.mxu0 0.0
        %376 = vmatprep.subr.mxu0 0.0
        %377 = vmatpush2.msra.mxu0 0.0
        %378 = vmatprep.subr.mxu0 0.0
        %379 = vmatpush2.msra.mxu0 0.0
        %380 = vmatprep.subr.mxu0 0.0
        %381 = vmatpush2.msra.mxu0 0.0
        %382 = vmatprep.subr.mxu0 0.0
        %383 = vmatpush2.msra.mxu0 0.0
        %384 = vmatprep.subr.mxu0 0.0
        %385 = vmatpush2.msra.mxu0 0.0
        %386 = vmatprep.subr.mxu0 0.0
        %387 = vmatpush2.msra.mxu0 0.0
        %388 = vmatprep.mubr.f32.mxu0 0.0
        %389 = vmatmul.mubr.f32.gmra.mxu0 %v307
        %v390 = vpop.f32.mrf.mxu0
        %v391 = vadd.f32 0.0, %v390
        %v392 = vpop.f32.mrf.mxu0
        %393 = vmatprep.mubr.f32.mxu0 0.0
        %394 = vmatmul.mubr.f32.gmra.mxu0 %v310
        %v395 = vpop.f32.mrf.mxu0
        %v396 = vadd.f32 0.0, %v395
        %v397 = vpop.f32.mrf.mxu0
        %398 = vmatprep.mubr.f32.mxu0 0.0
        %399 = vmatmul.mubr.f32.gmra.mxu0 %v313
        %v400 = vpop.f32.mrf.mxu0
        %v401 = vadd.f32 0.0, %v400
        %v402 = vpop.f32.mrf.mxu0
        %403 = vmatprep.mubr.f32.mxu0 0.0
        %404 = vmatmul.mubr.f32.gmra.mxu0 %v316
        %v405 = vpop.f32.mrf.mxu0
        %v406 = vadd.f32 0.0, %v405
        %v407 = vpop.f32.mrf.mxu0
        %408 = vmatprep.mubr.f32.mxu0 0.0
        %409 = vmatmul.mubr.f32.gmra.mxu0 %v319
        %v410 = vpop.f32.mrf.mxu0
        %v411 = vadd.f32 0.0, %v410
        %v412 = vpop.f32.mrf.mxu0
        %413 = vmatprep.mubr.f32.mxu0 0.0
        %414 = vmatmul.mubr.f32.gmra.mxu0 %v322
        %v415 = vpop.f32.mrf.mxu0
        %v416 = vadd.f32 0.0, %v415
        %v417 = vpop.f32.mrf.mxu0
        %418 = vdwg.mxu0
        %v420 = vsel %vm305, %v295, 0
        %v423 = vsel %vm305, %v296, 0
        %v426 = vsel %vm305, %v297, 0
        %v429 = vsel %vm305, %v298, 0
        %v432 = vsel %vm305, %v299, 0
        %v435 = vsel %vm305, %v300, 0
        %437 = vmatprep.subr.mxu0 0.0
        %438 = vmatpush1.msra.mxu0 0.0
        %439 = vmatprep.subr.mxu0 0.0
        %440 = vmatpush1.msra.mxu0 0.0
        %441 = vmatprep.subr.mxu0 0.0
        %442 = vmatpush1.msra.mxu0 0.0
        %443 = vmatprep.subr.mxu0 0.0
        %444 = vmatpush1.msra.mxu0 0.0
        %445 = vmatprep.subr.mxu0 0.0
        %446 = vmatpush1.msra.mxu0 0.0
        %447 = vmatprep.subr.mxu0 0.0
        %448 = vmatpush1.msra.mxu0 0.0
        %449 = vmatprep.subr.mxu0 0.0
        %450 = vmatpush1.msra.mxu0 0.0
        %451 = vmatprep.subr.mxu0 0.0
        %452 = vmatpush1.msra.mxu0 0.0
        %453 = vmatprep.subr.mxu0 0.0
        %454 = vmatpush1.msra.mxu0 0.0
        %455 = vmatprep.subr.mxu0 0.0
        %456 = vmatpush1.msra.mxu0 0.0
        %457 = vmatprep.subr.mxu0 0.0
        %458 = vmatpush1.msra.mxu0 0.0
        %459 = vmatprep.subr.mxu0 0.0
        %460 = vmatpush1.msra.mxu0 0.0
        %461 = vmatprep.subr.mxu0 0.0
        %462 = vmatpush1.msra.mxu0 0.0
        %463 = vmatprep.subr.mxu0 0.0
        %464 = vmatpush1.msra.mxu0 0.0
        %465 = vmatprep.subr.mxu0 0.0
        %466 = vmatpush1.msra.mxu0 %v304
        %467 = vmatprep.subr.mxu0 0.0
        %468 = vmatpush1.msra.mxu0 %v303
        %469 = vmatprep.subr.mxu0 0.0
        %470 = vmatpush2.msra.mxu0 0.0
        %471 = vmatprep.subr.mxu0 0.0
        %472 = vmatpush2.msra.mxu0 0.0
        %473 = vmatprep.subr.mxu0 0.0
        %474 = vmatpush2.msra.mxu0 0.0
        %475 = vmatprep.subr.mxu0 0.0
        %476 = vmatpush2.msra.mxu0 0.0
        %477 = vmatprep.subr.mxu0 0.0
        %478 = vmatpush2.msra.mxu0 0.0
        %479 = vmatprep.subr.mxu0 0.0
        %480 = vmatpush2.msra.mxu0 0.0
        %481 = vmatprep.subr.mxu0 0.0
        %482 = vmatpush2.msra.mxu0 0.0
        %483 = vmatprep.subr.mxu0 0.0
        %484 = vmatpush2.msra.mxu0 0.0
        %485 = vmatprep.subr.mxu0 0.0
        %486 = vmatpush2.msra.mxu0 0.0
        %487 = vmatprep.subr.mxu0 0.0
        %488 = vmatpush2.msra.mxu0 0.0
        %489 = vmatprep.subr.mxu0 0.0
        %490 = vmatpush2.msra.mxu0 0.0
        %491 = vmatprep.subr.mxu0 0.0
        %492 = vmatpush2.msra.mxu0 0.0
        %493 = vmatprep.subr.mxu0 0.0
        %494 = vmatpush2.msra.mxu0 0.0
        %495 = vmatprep.subr.mxu0 0.0
        %496 = vmatpush2.msra.mxu0 0.0
        %497 = vmatprep.subr.mxu0 0.0
        %498 = vmatpush2.msra.mxu0 0.0
        %499 = vmatprep.subr.mxu0 0.0
        %500 = vmatpush2.msra.mxu0 0.0
        %501 = vmatprep.mubr.f32.mxu0 0.0
        %502 = vmatmul.mubr.f32.gmra.mxu0 %v420
        %v503 = vpop.f32.mrf.mxu0
        %v504 = vadd.f32 0.0, %v503
        %v505 = vpop.f32.mrf.mxu0
        %506 = vmatprep.mubr.f32.mxu0 0.0
        %507 = vmatmul.mubr.f32.gmra.mxu0 %v423
        %v508 = vpop.f32.mrf.mxu0
        %v509 = vadd.f32 0.0, %v508
        %v510 = vpop.f32.mrf.mxu0
        %511 = vmatprep.mubr.f32.mxu0 0.0
        %512 = vmatmul.mubr.f32.gmra.mxu0 %v426
        %v513 = vpop.f32.mrf.mxu0
        %v514 = vadd.f32 0.0, %v513
        %v515 = vpop.f32.mrf.mxu0
        %516 = vmatprep.mubr.f32.mxu0 0.0
        %517 = vmatmul.mubr.f32.gmra.mxu0 %v429
        %v518 = vpop.f32.mrf.mxu0
        %v519 = vadd.f32 0.0, %v518
        %v520 = vpop.f32.mrf.mxu0
        %521 = vmatprep.mubr.f32.mxu0 0.0
        %522 = vmatmul.mubr.f32.gmra.mxu0 %v432
        %v523 = vpop.f32.mrf.mxu0
        %v524 = vadd.f32 0.0, %v523
        %v525 = vpop.f32.mrf.mxu0
        %526 = vmatprep.mubr.f32.mxu0 0.0
        %527 = vmatmul.mubr.f32.gmra.mxu0 %v435
        %v528 = vpop.f32.mrf.mxu0
        %v529 = vadd.f32 0.0, %v528
        %v530 = vpop.f32.mrf.mxu0
        %531 = vdwg.mxu0
        %v532 = vmul.f32 %v289, %v289
        %v533 = vmul.f32 %v290, %v290
        %v534 = vmul.f32 %v291, %v291
        %v535 = vmul.f32 %v292, %v292
        %v536 = vmul.f32 %v293, %v293
        %v537 = vmul.f32 %v294, %v294
        %v539 = vsel %vm305, %v532, 0
        %v542 = vsel %vm305, %v533, 0
        %v545 = vsel %vm305, %v534, 0
        %v548 = vsel %vm305, %v535, 0
        %v551 = vsel %vm305, %v536, 0
        %v554 = vsel %vm305, %v537, 0
        %556 = vmatprep.subr.mxu0 0.0
        %557 = vmatpush1.msra.mxu0 0.0
        %558 = vmatprep.subr.mxu0 0.0
        %559 = vmatpush1.msra.mxu0 0.0
        %560 = vmatprep.subr.mxu0 0.0
        %561 = vmatpush1.msra.mxu0 0.0
        %562 = vmatprep.subr.mxu0 0.0
        %563 = vmatpush1.msra.mxu0 0.0
        %564 = vmatprep.subr.mxu0 0.0
        %565 = vmatpush1.msra.mxu0 0.0
        %566 = vmatprep.subr.mxu0 0.0
        %567 = vmatpush1.msra.mxu0 0.0
        %568 = vmatprep.subr.mxu0 0.0
        %569 = vmatpush1.msra.mxu0 0.0
        %570 = vmatprep.subr.mxu0 0.0
        %571 = vmatpush1.msra.mxu0 0.0
        %572 = vmatprep.subr.mxu0 0.0
        %573 = vmatpush1.msra.mxu0 0.0
        %574 = vmatprep.subr.mxu0 0.0
        %575 = vmatpush1.msra.mxu0 0.0
        %576 = vmatprep.subr.mxu0 0.0
        %577 = vmatpush1.msra.mxu0 0.0
        %578 = vmatprep.subr.mxu0 0.0
        %579 = vmatpush1.msra.mxu0 0.0
        %580 = vmatprep.subr.mxu0 0.0
        %581 = vmatpush1.msra.mxu0 0.0
        %582 = vmatprep.subr.mxu0 0.0
        %583 = vmatpush1.msra.mxu0 0.0
        %584 = vmatprep.subr.mxu0 0.0
        %585 = vmatpush1.msra.mxu0 %v304
        %586 = vmatprep.subr.mxu0 0.0
        %587 = vmatpush1.msra.mxu0 %v303
        %588 = vmatprep.subr.mxu0 0.0
        %589 = vmatpush2.msra.mxu0 0.0
        %590 = vmatprep.subr.mxu0 0.0
        %591 = vmatpush2.msra.mxu0 0.0
        %592 = vmatprep.subr.mxu0 0.0
        %593 = vmatpush2.msra.mxu0 0.0
        %594 = vmatprep.subr.mxu0 0.0
        %595 = vmatpush2.msra.mxu0 0.0
        %596 = vmatprep.subr.mxu0 0.0
        %597 = vmatpush2.msra.mxu0 0.0
        %598 = vmatprep.subr.mxu0 0.0
        %599 = vmatpush2.msra.mxu0 0.0
        %600 = vmatprep.subr.mxu0 0.0
        %601 = vmatpush2.msra.mxu0 0.0
        %602 = vmatprep.subr.mxu0 0.0
        %603 = vmatpush2.msra.mxu0 0.0
        %604 = vmatprep.subr.mxu0 0.0
        %605 = vmatpush2.msra.mxu0 0.0
        %606 = vmatprep.subr.mxu0 0.0
        %607 = vmatpush2.msra.mxu0 0.0
        %608 = vmatprep.subr.mxu0 0.0
        %609 = vmatpush2.msra.mxu0 0.0
        %610 = vmatprep.subr.mxu0 0.0
        %611 = vmatpush2.msra.mxu0 0.0
        %612 = vmatprep.subr.mxu0 0.0
        %613 = vmatpush2.msra.mxu0 0.0
        %614 = vmatprep.subr.mxu0 0.0
        %615 = vmatpush2.msra.mxu0 0.0
        %616 = vmatprep.subr.mxu0 0.0
        %617 = vmatpush2.msra.mxu0 0.0
        %618 = vmatprep.subr.mxu0 0.0
        %619 = vmatpush2.msra.mxu0 0.0
        %620 = vmatprep.mubr.f32.mxu0 0.0
        %621 = vmatmul.mubr.f32.gmra.mxu0 %v539
        %v622 = vpop.f32.mrf.mxu0
        %v623 = vadd.f32 0.0, %v622
        %v624 = vpop.f32.mrf.mxu0
        %625 = vmatprep.mubr.f32.mxu0 0.0
        %626 = vmatmul.mubr.f32.gmra.mxu0 %v542
        %v627 = vpop.f32.mrf.mxu0
        %v628 = vadd.f32 0.0, %v627
        %v629 = vpop.f32.mrf.mxu0
        %630 = vmatprep.mubr.f32.mxu0 0.0
        %631 = vmatmul.mubr.f32.gmra.mxu0 %v545
        %v632 = vpop.f32.mrf.mxu0
        %v633 = vadd.f32 0.0, %v632
        %v634 = vpop.f32.mrf.mxu0
        %635 = vmatprep.mubr.f32.mxu0 0.0
        %636 = vmatmul.mubr.f32.gmra.mxu0 %v548
        %v637 = vpop.f32.mrf.mxu0
        %v638 = vadd.f32 0.0, %v637
        %v639 = vpop.f32.mrf.mxu0
        %640 = vmatprep.mubr.f32.mxu0 0.0
        %641 = vmatmul.mubr.f32.gmra.mxu0 %v551
        %v642 = vpop.f32.mrf.mxu0
        %v643 = vadd.f32 0.0, %v642
        %v644 = vpop.f32.mrf.mxu0
        %645 = vmatprep.mubr.f32.mxu0 0.0
        %646 = vmatmul.mubr.f32.gmra.mxu0 %v554
        %v647 = vpop.f32.mrf.mxu0
        %v648 = vadd.f32 0.0, %v647
        %v649 = vpop.f32.mrf.mxu0
        %650 = vdwg.mxu0
        %v651 = vmul.f32 %v295, %v295
        %v652 = vmul.f32 %v296, %v296
        %v653 = vmul.f32 %v297, %v297
        %v654 = vmul.f32 %v298, %v298
        %v655 = vmul.f32 %v299, %v299
        %v656 = vmul.f32 %v300, %v300
        %v658 = vsel %vm305, %v651, 0
        %v661 = vsel %vm305, %v652, 0
        %v664 = vsel %vm305, %v653, 0
        %v667 = vsel %vm305, %v654, 0
        %v670 = vsel %vm305, %v655, 0
        %v673 = vsel %vm305, %v656, 0
        %675 = vmatprep.subr.mxu0 0.0
        %676 = vmatpush1.msra.mxu0 0.0
        %677 = vmatprep.subr.mxu0 0.0
        %678 = vmatpush1.msra.mxu0 0.0
        %679 = vmatprep.subr.mxu0 0.0
        %680 = vmatpush1.msra.mxu0 0.0
        %681 = vmatprep.subr.mxu0 0.0
        %682 = vmatpush1.msra.mxu0 0.0
        %683 = vmatprep.subr.mxu0 0.0
        %684 = vmatpush1.msra.mxu0 0.0
        %685 = vmatprep.subr.mxu0 0.0
        %686 = vmatpush1.msra.mxu0 0.0
        %687 = vmatprep.subr.mxu0 0.0
        %688 = vmatpush1.msra.mxu0 0.0
        %689 = vmatprep.subr.mxu0 0.0
        %690 = vmatpush1.msra.mxu0 0.0
        %691 = vmatprep.subr.mxu0 0.0
        %692 = vmatpush1.msra.mxu0 0.0
        %693 = vmatprep.subr.mxu0 0.0
        %694 = vmatpush1.msra.mxu0 0.0
        %695 = vmatprep.subr.mxu0 0.0
        %696 = vmatpush1.msra.mxu0 0.0
        %697 = vmatprep.subr.mxu0 0.0
        %698 = vmatpush1.msra.mxu0 0.0
        %699 = vmatprep.subr.mxu0 0.0
        %700 = vmatpush1.msra.mxu0 0.0
        %701 = vmatprep.subr.mxu0 0.0
        %702 = vmatpush1.msra.mxu0 0.0
        %703 = vmatprep.subr.mxu0 0.0
        %704 = vmatpush1.msra.mxu0 %v304
        %705 = vmatprep.subr.mxu0 0.0
        %706 = vmatpush1.msra.mxu0 %v303
        %707 = vmatprep.subr.mxu0 0.0
        %708 = vmatpush2.msra.mxu0 0.0
        %709 = vmatprep.subr.mxu0 0.0
        %710 = vmatpush2.msra.mxu0 0.0
        %711 = vmatprep.subr.mxu0 0.0
        %712 = vmatpush2.msra.mxu0 0.0
        %713 = vmatprep.subr.mxu0 0.0
        %714 = vmatpush2.msra.mxu0 0.0
        %715 = vmatprep.subr.mxu0 0.0
        %716 = vmatpush2.msra.mxu0 0.0
        %717 = vmatprep.subr.mxu0 0.0
        %718 = vmatpush2.msra.mxu0 0.0
        %719 = vmatprep.subr.mxu0 0.0
        %720 = vmatpush2.msra.mxu0 0.0
        %721 = vmatprep.subr.mxu0 0.0
        %722 = vmatpush2.msra.mxu0 0.0
        %723 = vmatprep.subr.mxu0 0.0
        %724 = vmatpush2.msra.mxu0 0.0
        %725 = vmatprep.subr.mxu0 0.0
        %726 = vmatpush2.msra.mxu0 0.0
        %727 = vmatprep.subr.mxu0 0.0
        %728 = vmatpush2.msra.mxu0 0.0
        %729 = vmatprep.subr.mxu0 0.0
        %730 = vmatpush2.msra.mxu0 0.0
        %731 = vmatprep.subr.mxu0 0.0
        %732 = vmatpush2.msra.mxu0 0.0
        %733 = vmatprep.subr.mxu0 0.0
        %734 = vmatpush2.msra.mxu0 0.0
        %735 = vmatprep.subr.mxu0 0.0
        %736 = vmatpush2.msra.mxu0 0.0
        %737 = vmatprep.subr.mxu0 0.0
        %738 = vmatpush2.msra.mxu0 0.0
        %739 = vmatprep.mubr.f32.mxu0 0.0
        %740 = vmatmul.mubr.f32.gmra.mxu0 %v658
        %v741 = vpop.f32.mrf.mxu0
        %v742 = vadd.f32 0.0, %v741
        %v743 = vpop.f32.mrf.mxu0
        %744 = vmatprep.mubr.f32.mxu0 0.0
        %745 = vmatmul.mubr.f32.gmra.mxu0 %v661
        %v746 = vpop.f32.mrf.mxu0
        %v747 = vadd.f32 0.0, %v746
        %v748 = vpop.f32.mrf.mxu0
        %749 = vmatprep.mubr.f32.mxu0 0.0
        %750 = vmatmul.mubr.f32.gmra.mxu0 %v664
        %v751 = vpop.f32.mrf.mxu0
        %v752 = vadd.f32 0.0, %v751
        %v753 = vpop.f32.mrf.mxu0
        %754 = vmatprep.mubr.f32.mxu0 0.0
        %755 = vmatmul.mubr.f32.gmra.mxu0 %v667
        %v756 = vpop.f32.mrf.mxu0
        %v757 = vadd.f32 0.0, %v756
        %v758 = vpop.f32.mrf.mxu0
        %759 = vmatprep.mubr.f32.mxu0 0.0
        %760 = vmatmul.mubr.f32.gmra.mxu0 %v670
        %v761 = vpop.f32.mrf.mxu0
        %v762 = vadd.f32 0.0, %v761
        %v763 = vpop.f32.mrf.mxu0
        %764 = vmatprep.mubr.f32.mxu0 0.0
        %765 = vmatmul.mubr.f32.gmra.mxu0 %v673
        %v766 = vpop.f32.mrf.mxu0
        %v767 = vadd.f32 0.0, %v766
        %v768 = vpop.f32.mrf.mxu0
        %769 = vdwg.mxu0
        %v770 = vmul.f32 %v289, %v295
        %v771 = vmul.f32 %v290, %v296
        %v772 = vmul.f32 %v291, %v297
        %v773 = vmul.f32 %v292, %v298
        %v774 = vmul.f32 %v293, %v299
        %v775 = vmul.f32 %v294, %v300
        %v777 = vsel %vm305, %v770, 0
        %v780 = vsel %vm305, %v771, 0
        %v783 = vsel %vm305, %v772, 0
        %v786 = vsel %vm305, %v773, 0
        %v789 = vsel %vm305, %v774, 0
        %v792 = vsel %vm305, %v775, 0
        %794 = vmatprep.subr.mxu0 0.0
        %795 = vmatpush1.msra.mxu0 0.0
        %796 = vmatprep.subr.mxu0 0.0
        %797 = vmatpush1.msra.mxu0 0.0
        %798 = vmatprep.subr.mxu0 0.0
        %799 = vmatpush1.msra.mxu0 0.0
        %800 = vmatprep.subr.mxu0 0.0
        %801 = vmatpush1.msra.mxu0 0.0
        %802 = vmatprep.subr.mxu0 0.0
        %803 = vmatpush1.msra.mxu0 0.0
        %804 = vmatprep.subr.mxu0 0.0
        %805 = vmatpush1.msra.mxu0 0.0
        %806 = vmatprep.subr.mxu0 0.0
        %807 = vmatpush1.msra.mxu0 0.0
        %808 = vmatprep.subr.mxu0 0.0
        %809 = vmatpush1.msra.mxu0 0.0
        %810 = vmatprep.subr.mxu0 0.0
        %811 = vmatpush1.msra.mxu0 0.0
        %812 = vmatprep.subr.mxu0 0.0
        %813 = vmatpush1.msra.mxu0 0.0
        %814 = vmatprep.subr.mxu0 0.0
        %815 = vmatpush1.msra.mxu0 0.0
        %816 = vmatprep.subr.mxu0 0.0
        %817 = vmatpush1.msra.mxu0 0.0
        %818 = vmatprep.subr.mxu0 0.0
        %819 = vmatpush1.msra.mxu0 0.0
        %820 = vmatprep.subr.mxu0 0.0
        %821 = vmatpush1.msra.mxu0 0.0
        %822 = vmatprep.subr.mxu0 0.0
        %823 = vmatpush1.msra.mxu0 %v304
        %824 = vmatprep.subr.mxu0 0.0
        %825 = vmatpush1.msra.mxu0 %v303
        %826 = vmatprep.subr.mxu0 0.0
        %827 = vmatpush2.msra.mxu0 0.0
        %828 = vmatprep.subr.mxu0 0.0
        %829 = vmatpush2.msra.mxu0 0.0
        %830 = vmatprep.subr.mxu0 0.0
        %831 = vmatpush2.msra.mxu0 0.0
        %832 = vmatprep.subr.mxu0 0.0
        %833 = vmatpush2.msra.mxu0 0.0
        %834 = vmatprep.subr.mxu0 0.0
        %835 = vmatpush2.msra.mxu0 0.0
        %836 = vmatprep.subr.mxu0 0.0
        %837 = vmatpush2.msra.mxu0 0.0
        %838 = vmatprep.subr.mxu0 0.0
        %839 = vmatpush2.msra.mxu0 0.0
        %840 = vmatprep.subr.mxu0 0.0
        %841 = vmatpush2.msra.mxu0 0.0
        %842 = vmatprep.subr.mxu0 0.0
        %843 = vmatpush2.msra.mxu0 0.0
        %844 = vmatprep.subr.mxu0 0.0
        %845 = vmatpush2.msra.mxu0 0.0
        %846 = vmatprep.subr.mxu0 0.0
        %847 = vmatpush2.msra.mxu0 0.0
        %848 = vmatprep.subr.mxu0 0.0
        %849 = vmatpush2.msra.mxu0 0.0
        %850 = vmatprep.subr.mxu0 0.0
        %851 = vmatpush2.msra.mxu0 0.0
        %852 = vmatprep.subr.mxu0 0.0
        %853 = vmatpush2.msra.mxu0 0.0
        %854 = vmatprep.subr.mxu0 0.0
        %855 = vmatpush2.msra.mxu0 0.0
        %856 = vmatprep.subr.mxu0 0.0
        %857 = vmatpush2.msra.mxu0 0.0
        %858 = vmatprep.mubr.f32.mxu0 0.0
        %859 = vmatmul.mubr.f32.gmra.mxu0 %v777
        %v860 = vpop.f32.mrf.mxu0
        %v861 = vadd.f32 0.0, %v860
        %v862 = vpop.f32.mrf.mxu0
        %863 = vmatprep.mubr.f32.mxu0 0.0
        %864 = vmatmul.mubr.f32.gmra.mxu0 %v780
        %v865 = vpop.f32.mrf.mxu0
        %v866 = vadd.f32 0.0, %v865
        %v867 = vpop.f32.mrf.mxu0
        %868 = vmatprep.mubr.f32.mxu0 0.0
        %869 = vmatmul.mubr.f32.gmra.mxu0 %v783
        %v870 = vpop.f32.mrf.mxu0
        %v871 = vadd.f32 0.0, %v870
        %v872 = vpop.f32.mrf.mxu0
        %873 = vmatprep.mubr.f32.mxu0 0.0
        %874 = vmatmul.mubr.f32.gmra.mxu0 %v786
        %v875 = vpop.f32.mrf.mxu0
        %v876 = vadd.f32 0.0, %v875
        %v877 = vpop.f32.mrf.mxu0
        %878 = vmatprep.mubr.f32.mxu0 0.0
        %879 = vmatmul.mubr.f32.gmra.mxu0 %v789
        %v880 = vpop.f32.mrf.mxu0
        %v881 = vadd.f32 0.0, %v880
        %v882 = vpop.f32.mrf.mxu0
        %883 = vmatprep.mubr.f32.mxu0 0.0
        %884 = vmatmul.mubr.f32.gmra.mxu0 %v792
        %v885 = vpop.f32.mrf.mxu0
        %v886 = vadd.f32 0.0, %v885
        %v887 = vpop.f32.mrf.mxu0
        %888 = vdwg.mxu0
        %v890 = vsel %vm305, %v301, 0
        %v893 = vsel %vm305, %v302, 0
        %895 = vmatprep.subr.mxu0 0.0
        %896 = vmatpush1.msra.mxu0 0.0
        %897 = vmatprep.subr.mxu0 0.0
        %898 = vmatpush1.msra.mxu0 0.0
        %899 = vmatprep.subr.mxu0 0.0
        %900 = vmatpush1.msra.mxu0 0.0
        %901 = vmatprep.subr.mxu0 0.0
        %902 = vmatpush1.msra.mxu0 0.0
        %903 = vmatprep.subr.mxu0 0.0
        %904 = vmatpush1.msra.mxu0 0.0
        %905 = vmatprep.subr.mxu0 0.0
        %906 = vmatpush1.msra.mxu0 0.0
        %907 = vmatprep.subr.mxu0 0.0
        %908 = vmatpush1.msra.mxu0 0.0
        %909 = vmatprep.subr.mxu0 0.0
        %910 = vmatpush1.msra.mxu0 0.0
        %911 = vmatprep.subr.mxu0 0.0
        %912 = vmatpush1.msra.mxu0 0.0
        %913 = vmatprep.subr.mxu0 0.0
        %914 = vmatpush1.msra.mxu0 0.0
        %915 = vmatprep.subr.mxu0 0.0
        %916 = vmatpush1.msra.mxu0 0.0
        %917 = vmatprep.subr.mxu0 0.0
        %918 = vmatpush1.msra.mxu0 0.0
        %919 = vmatprep.subr.mxu0 0.0
        %920 = vmatpush1.msra.mxu0 0.0
        %921 = vmatprep.subr.mxu0 0.0
        %922 = vmatpush1.msra.mxu0 0.0
        %923 = vmatprep.subr.mxu0 0.0
        %924 = vmatpush1.msra.mxu0 %v396
        %925 = vmatprep.subr.mxu0 0.0
        %926 = vmatpush1.msra.mxu0 %v391
        %927 = vmatprep.subr.mxu0 0.0
        %928 = vmatpush2.msra.mxu0 0.0
        %929 = vmatprep.subr.mxu0 0.0
        %930 = vmatpush2.msra.mxu0 0.0
        %931 = vmatprep.subr.mxu0 0.0
        %932 = vmatpush2.msra.mxu0 0.0
        %933 = vmatprep.subr.mxu0 0.0
        %934 = vmatpush2.msra.mxu0 0.0
        %935 = vmatprep.subr.mxu0 0.0
        %936 = vmatpush2.msra.mxu0 0.0
        %937 = vmatprep.subr.mxu0 0.0
        %938 = vmatpush2.msra.mxu0 0.0
        %939 = vmatprep.subr.mxu0 0.0
        %940 = vmatpush2.msra.mxu0 0.0
        %941 = vmatprep.subr.mxu0 0.0
        %942 = vmatpush2.msra.mxu0 0.0
        %943 = vmatprep.subr.mxu0 0.0
        %944 = vmatpush2.msra.mxu0 0.0
        %945 = vmatprep.subr.mxu0 0.0
        %946 = vmatpush2.msra.mxu0 0.0
        %947 = vmatprep.subr.mxu0 0.0
        %948 = vmatpush2.msra.mxu0 0.0
        %949 = vmatprep.subr.mxu0 0.0
        %950 = vmatpush2.msra.mxu0 0.0
        %951 = vmatprep.subr.mxu0 0.0
        %952 = vmatpush2.msra.mxu0 0.0
        %953 = vmatprep.subr.mxu0 0.0
        %954 = vmatpush2.msra.mxu0 0.0
        %955 = vmatprep.subr.mxu0 0.0
        %956 = vmatpush2.msra.mxu0 0.0
        %957 = vmatprep.subr.mxu0 0.0
        %958 = vmatpush2.msra.mxu0 0.0
        %959 = vmatprep.mubr.f32.mxu0 0.0
        %960 = vmatmul.mubr.f32.gmra.mxu0 %v890
        %v961 = vpop.f32.mrf.mxu0
        %v962 = vadd.f32 0.0, %v961
        %v963 = vpop.f32.mrf.mxu0
        %964 = vmatprep.mubr.f32.mxu0 0.0
        %965 = vmatmul.mubr.f32.gmra.mxu0 %v893
        %v966 = vpop.f32.mrf.mxu0
        %v967 = vadd.f32 0.0, %v966
        %v968 = vpop.f32.mrf.mxu0
        %969 = vdwg.mxu0
        %970 = vmatprep.subr.mxu0 0.0
        %971 = vmatpush1.msra.mxu0 0.0
        %972 = vmatprep.subr.mxu0 0.0
        %973 = vmatpush1.msra.mxu0 0.0
        %974 = vmatprep.subr.mxu0 0.0
        %975 = vmatpush1.msra.mxu0 0.0
        %976 = vmatprep.subr.mxu0 0.0
        %977 = vmatpush1.msra.mxu0 0.0
        %978 = vmatprep.subr.mxu0 0.0
        %979 = vmatpush1.msra.mxu0 0.0
        %980 = vmatprep.subr.mxu0 0.0
        %981 = vmatpush1.msra.mxu0 0.0
        %982 = vmatprep.subr.mxu0 0.0
        %983 = vmatpush1.msra.mxu0 0.0
        %984 = vmatprep.subr.mxu0 0.0
        %985 = vmatpush1.msra.mxu0 0.0
        %986 = vmatprep.subr.mxu0 0.0
        %987 = vmatpush1.msra.mxu0 0.0
        %988 = vmatprep.subr.mxu0 0.0
        %989 = vmatpush1.msra.mxu0 0.0
        %990 = vmatprep.subr.mxu0 0.0
        %991 = vmatpush1.msra.mxu0 0.0
        %992 = vmatprep.subr.mxu0 0.0
        %993 = vmatpush1.msra.mxu0 0.0
        %994 = vmatprep.subr.mxu0 0.0
        %995 = vmatpush1.msra.mxu0 0.0
        %996 = vmatprep.subr.mxu0 0.0
        %997 = vmatpush1.msra.mxu0 0.0
        %998 = vmatprep.subr.mxu0 0.0
        %999 = vmatpush1.msra.mxu0 %v509
        %1000 = vmatprep.subr.mxu0 0.0
        %1001 = vmatpush1.msra.mxu0 %v504
        %1002 = vmatprep.subr.mxu0 0.0
        %1003 = vmatpush2.msra.mxu0 0.0
        %1004 = vmatprep.subr.mxu0 0.0
        %1005 = vmatpush2.msra.mxu0 0.0
        %1006 = vmatprep.subr.mxu0 0.0
        %1007 = vmatpush2.msra.mxu0 0.0
        %1008 = vmatprep.subr.mxu0 0.0
        %1009 = vmatpush2.msra.mxu0 0.0
        %1010 = vmatprep.subr.mxu0 0.0
        %1011 = vmatpush2.msra.mxu0 0.0
        %1012 = vmatprep.subr.mxu0 0.0
        %1013 = vmatpush2.msra.mxu0 0.0
        %1014 = vmatprep.subr.mxu0 0.0
        %1015 = vmatpush2.msra.mxu0 0.0
        %1016 = vmatprep.subr.mxu0 0.0
        %1017 = vmatpush2.msra.mxu0 0.0
        %1018 = vmatprep.subr.mxu0 0.0
        %1019 = vmatpush2.msra.mxu0 0.0
        %1020 = vmatprep.subr.mxu0 0.0
        %1021 = vmatpush2.msra.mxu0 0.0
        %1022 = vmatprep.subr.mxu0 0.0
        %1023 = vmatpush2.msra.mxu0 0.0
        %1024 = vmatprep.subr.mxu0 0.0
        %1025 = vmatpush2.msra.mxu0 0.0
        %1026 = vmatprep.subr.mxu0 0.0
        %1027 = vmatpush2.msra.mxu0 0.0
        %1028 = vmatprep.subr.mxu0 0.0
        %1029 = vmatpush2.msra.mxu0 0.0
        %1030 = vmatprep.subr.mxu0 0.0
        %1031 = vmatpush2.msra.mxu0 0.0
        %1032 = vmatprep.subr.mxu0 0.0
        %1033 = vmatpush2.msra.mxu0 0.0
        %1034 = vmatprep.mubr.f32.mxu0 0.0
        %1035 = vmatmul.mubr.f32.gmra.mxu0 %v890
        %v1036 = vpop.f32.mrf.mxu0
        %v1037 = vadd.f32 0.0, %v1036
        %v1038 = vpop.f32.mrf.mxu0
        %1039 = vmatprep.mubr.f32.mxu0 0.0
        %1040 = vmatmul.mubr.f32.gmra.mxu0 %v893
        %v1041 = vpop.f32.mrf.mxu0
        %v1042 = vadd.f32 0.0, %v1041
        %v1043 = vpop.f32.mrf.mxu0
        %1044 = vdwg.mxu0
        %1045 = vmatprep.subr.mxu0 0.0
        %1046 = vmatpush1.msra.mxu0 0.0
        %1047 = vmatprep.subr.mxu0 0.0
        %1048 = vmatpush1.msra.mxu0 0.0
        %1049 = vmatprep.subr.mxu0 0.0
        %1050 = vmatpush1.msra.mxu0 0.0
        %1051 = vmatprep.subr.mxu0 0.0
        %1052 = vmatpush1.msra.mxu0 0.0
        %1053 = vmatprep.subr.mxu0 0.0
        %1054 = vmatpush1.msra.mxu0 0.0
        %1055 = vmatprep.subr.mxu0 0.0
        %1056 = vmatpush1.msra.mxu0 0.0
        %1057 = vmatprep.subr.mxu0 0.0
        %1058 = vmatpush1.msra.mxu0 0.0
        %1059 = vmatprep.subr.mxu0 0.0
        %1060 = vmatpush1.msra.mxu0 0.0
        %1061 = vmatprep.subr.mxu0 0.0
        %1062 = vmatpush1.msra.mxu0 0.0
        %1063 = vmatprep.subr.mxu0 0.0
        %1064 = vmatpush1.msra.mxu0 0.0
        %1065 = vmatprep.subr.mxu0 0.0
        %1066 = vmatpush1.msra.mxu0 0.0
        %1067 = vmatprep.subr.mxu0 0.0
        %1068 = vmatpush1.msra.mxu0 0.0
        %1069 = vmatprep.subr.mxu0 0.0
        %1070 = vmatpush1.msra.mxu0 0.0
        %1071 = vmatprep.subr.mxu0 0.0
        %1072 = vmatpush1.msra.mxu0 0.0
        %1073 = vmatprep.subr.mxu0 0.0
        %1074 = vmatpush1.msra.mxu0 %v628
        %1075 = vmatprep.subr.mxu0 0.0
        %1076 = vmatpush1.msra.mxu0 %v623
        %1077 = vmatprep.subr.mxu0 0.0
        %1078 = vmatpush2.msra.mxu0 0.0
        %1079 = vmatprep.subr.mxu0 0.0
        %1080 = vmatpush2.msra.mxu0 0.0
        %1081 = vmatprep.subr.mxu0 0.0
        %1082 = vmatpush2.msra.mxu0 0.0
        %1083 = vmatprep.subr.mxu0 0.0
        %1084 = vmatpush2.msra.mxu0 0.0
        %1085 = vmatprep.subr.mxu0 0.0
        %1086 = vmatpush2.msra.mxu0 0.0
        %1087 = vmatprep.subr.mxu0 0.0
        %1088 = vmatpush2.msra.mxu0 0.0
        %1089 = vmatprep.subr.mxu0 0.0
        %1090 = vmatpush2.msra.mxu0 0.0
        %1091 = vmatprep.subr.mxu0 0.0
        %1092 = vmatpush2.msra.mxu0 0.0
        %1093 = vmatprep.subr.mxu0 0.0
        %1094 = vmatpush2.msra.mxu0 0.0
        %1095 = vmatprep.subr.mxu0 0.0
        %1096 = vmatpush2.msra.mxu0 0.0
        %1097 = vmatprep.subr.mxu0 0.0
        %1098 = vmatpush2.msra.mxu0 0.0
        %1099 = vmatprep.subr.mxu0 0.0
        %1100 = vmatpush2.msra.mxu0 0.0
        %1101 = vmatprep.subr.mxu0 0.0
        %1102 = vmatpush2.msra.mxu0 0.0
        %1103 = vmatprep.subr.mxu0 0.0
        %1104 = vmatpush2.msra.mxu0 0.0
        %1105 = vmatprep.subr.mxu0 0.0
        %1106 = vmatpush2.msra.mxu0 0.0
        %1107 = vmatprep.subr.mxu0 0.0
        %1108 = vmatpush2.msra.mxu0 0.0
        %1109 = vmatprep.mubr.f32.mxu0 0.0
        %1110 = vmatmul.mubr.f32.gmra.mxu0 %v890
        %v1111 = vpop.f32.mrf.mxu0
        %v1112 = vadd.f32 0.0, %v1111
        %v1113 = vpop.f32.mrf.mxu0
        %1114 = vmatprep.mubr.f32.mxu0 0.0
        %1115 = vmatmul.mubr.f32.gmra.mxu0 %v893
        %v1116 = vpop.f32.mrf.mxu0
        %v1117 = vadd.f32 0.0, %v1116
        %v1118 = vpop.f32.mrf.mxu0
        %1119 = vdwg.mxu0
        %1120 = vmatprep.subr.mxu0 0.0
        %1121 = vmatpush1.msra.mxu0 0.0
        %1122 = vmatprep.subr.mxu0 0.0
        %1123 = vmatpush1.msra.mxu0 0.0
        %1124 = vmatprep.subr.mxu0 0.0
        %1125 = vmatpush1.msra.mxu0 0.0
        %1126 = vmatprep.subr.mxu0 0.0
        %1127 = vmatpush1.msra.mxu0 0.0
        %1128 = vmatprep.subr.mxu0 0.0
        %1129 = vmatpush1.msra.mxu0 0.0
        %1130 = vmatprep.subr.mxu0 0.0
        %1131 = vmatpush1.msra.mxu0 0.0
        %1132 = vmatprep.subr.mxu0 0.0
        %1133 = vmatpush1.msra.mxu0 0.0
        %1134 = vmatprep.subr.mxu0 0.0
        %1135 = vmatpush1.msra.mxu0 0.0
        %1136 = vmatprep.subr.mxu0 0.0
        %1137 = vmatpush1.msra.mxu0 0.0
        %1138 = vmatprep.subr.mxu0 0.0
        %1139 = vmatpush1.msra.mxu0 0.0
        %1140 = vmatprep.subr.mxu0 0.0
        %1141 = vmatpush1.msra.mxu0 0.0
        %1142 = vmatprep.subr.mxu0 0.0
        %1143 = vmatpush1.msra.mxu0 0.0
        %1144 = vmatprep.subr.mxu0 0.0
        %1145 = vmatpush1.msra.mxu0 0.0
        %1146 = vmatprep.subr.mxu0 0.0
        %1147 = vmatpush1.msra.mxu0 0.0
        %1148 = vmatprep.subr.mxu0 0.0
        %1149 = vmatpush1.msra.mxu0 %v747
        %1150 = vmatprep.subr.mxu0 0.0
        %1151 = vmatpush1.msra.mxu0 %v742
        %1152 = vmatprep.subr.mxu0 0.0
        %1153 = vmatpush2.msra.mxu0 0.0
        %1154 = vmatprep.subr.mxu0 0.0
        %1155 = vmatpush2.msra.mxu0 0.0
        %1156 = vmatprep.subr.mxu0 0.0
        %1157 = vmatpush2.msra.mxu0 0.0
        %1158 = vmatprep.subr.mxu0 0.0
        %1159 = vmatpush2.msra.mxu0 0.0
        %1160 = vmatprep.subr.mxu0 0.0
        %1161 = vmatpush2.msra.mxu0 0.0
        %1162 = vmatprep.subr.mxu0 0.0
        %1163 = vmatpush2.msra.mxu0 0.0
        %1164 = vmatprep.subr.mxu0 0.0
        %1165 = vmatpush2.msra.mxu0 0.0
        %1166 = vmatprep.subr.mxu0 0.0
        %1167 = vmatpush2.msra.mxu0 0.0
        %1168 = vmatprep.subr.mxu0 0.0
        %1169 = vmatpush2.msra.mxu0 0.0
        %1170 = vmatprep.subr.mxu0 0.0
        %1171 = vmatpush2.msra.mxu0 0.0
        %1172 = vmatprep.subr.mxu0 0.0
        %1173 = vmatpush2.msra.mxu0 0.0
        %1174 = vmatprep.subr.mxu0 0.0
        %1175 = vmatpush2.msra.mxu0 0.0
        %1176 = vmatprep.subr.mxu0 0.0
        %1177 = vmatpush2.msra.mxu0 0.0
        %1178 = vmatprep.subr.mxu0 0.0
        %1179 = vmatpush2.msra.mxu0 0.0
        %1180 = vmatprep.subr.mxu0 0.0
        %1181 = vmatpush2.msra.mxu0 0.0
        %1182 = vmatprep.subr.mxu0 0.0
        %1183 = vmatpush2.msra.mxu0 0.0
        %1184 = vmatprep.mubr.f32.mxu0 0.0
        %1185 = vmatmul.mubr.f32.gmra.mxu0 %v890
        %v1186 = vpop.f32.mrf.mxu0
        %v1187 = vadd.f32 0.0, %v1186
        %v1188 = vpop.f32.mrf.mxu0
        %1189 = vmatprep.mubr.f32.mxu0 0.0
        %1190 = vmatmul.mubr.f32.gmra.mxu0 %v893
        %v1191 = vpop.f32.mrf.mxu0
        %v1192 = vadd.f32 0.0, %v1191
        %v1193 = vpop.f32.mrf.mxu0
        %1194 = vdwg.mxu0
        %1195 = vmatprep.subr.mxu0 0.0
        %1196 = vmatpush1.msra.mxu0 0.0
        %1197 = vmatprep.subr.mxu0 0.0
        %1198 = vmatpush1.msra.mxu0 0.0
        %1199 = vmatprep.subr.mxu0 0.0
        %1200 = vmatpush1.msra.mxu0 0.0
        %1201 = vmatprep.subr.mxu0 0.0
        %1202 = vmatpush1.msra.mxu0 0.0
        %1203 = vmatprep.subr.mxu0 0.0
        %1204 = vmatpush1.msra.mxu0 0.0
        %1205 = vmatprep.subr.mxu0 0.0
        %1206 = vmatpush1.msra.mxu0 0.0
        %1207 = vmatprep.subr.mxu0 0.0
        %1208 = vmatpush1.msra.mxu0 0.0
        %1209 = vmatprep.subr.mxu0 0.0
        %1210 = vmatpush1.msra.mxu0 0.0
        %1211 = vmatprep.subr.mxu0 0.0
        %1212 = vmatpush1.msra.mxu0 0.0
        %1213 = vmatprep.subr.mxu0 0.0
        %1214 = vmatpush1.msra.mxu0 0.0
        %1215 = vmatprep.subr.mxu0 0.0
        %1216 = vmatpush1.msra.mxu0 0.0
        %1217 = vmatprep.subr.mxu0 0.0
        %1218 = vmatpush1.msra.mxu0 0.0
        %1219 = vmatprep.subr.mxu0 0.0
        %1220 = vmatpush1.msra.mxu0 0.0
        %1221 = vmatprep.subr.mxu0 0.0
        %1222 = vmatpush1.msra.mxu0 0.0
        %1223 = vmatprep.subr.mxu0 0.0
        %1224 = vmatpush1.msra.mxu0 %v866
        %1225 = vmatprep.subr.mxu0 0.0
        %1226 = vmatpush1.msra.mxu0 %v861
        %1227 = vmatprep.subr.mxu0 0.0
        %1228 = vmatpush2.msra.mxu0 0.0
        %1229 = vmatprep.subr.mxu0 0.0
        %1230 = vmatpush2.msra.mxu0 0.0
        %1231 = vmatprep.subr.mxu0 0.0
        %1232 = vmatpush2.msra.mxu0 0.0
        %1233 = vmatprep.subr.mxu0 0.0
        %1234 = vmatpush2.msra.mxu0 0.0
        %1235 = vmatprep.subr.mxu0 0.0
        %1236 = vmatpush2.msra.mxu0 0.0
        %1237 = vmatprep.subr.mxu0 0.0
        %1238 = vmatpush2.msra.mxu0 0.0
        %1239 = vmatprep.subr.mxu0 0.0
        %1240 = vmatpush2.msra.mxu0 0.0
        %1241 = vmatprep.subr.mxu0 0.0
        %1242 = vmatpush2.msra.mxu0 0.0
        %1243 = vmatprep.subr.mxu0 0.0
        %1244 = vmatpush2.msra.mxu0 0.0
        %1245 = vmatprep.subr.mxu0 0.0
        %1246 = vmatpush2.msra.mxu0 0.0
        %1247 = vmatprep.subr.mxu0 0.0
        %1248 = vmatpush2.msra.mxu0 0.0
        %1249 = vmatprep.subr.mxu0 0.0
        %1250 = vmatpush2.msra.mxu0 0.0
        %1251 = vmatprep.subr.mxu0 0.0
        %1252 = vmatpush2.msra.mxu0 0.0
        %1253 = vmatprep.subr.mxu0 0.0
        %1254 = vmatpush2.msra.mxu0 0.0
        %1255 = vmatprep.subr.mxu0 0.0
        %1256 = vmatpush2.msra.mxu0 0.0
        %1257 = vmatprep.subr.mxu0 0.0
        %1258 = vmatpush2.msra.mxu0 0.0
        %1259 = vmatprep.mubr.f32.mxu0 0.0
        %1260 = vmatmul.mubr.f32.gmra.mxu0 %v890
        %v1261 = vpop.f32.mrf.mxu0
        %v1262 = vadd.f32 0.0, %v1261
        %v1263 = vpop.f32.mrf.mxu0
        %1264 = vmatprep.mubr.f32.mxu0 0.0
        %1265 = vmatmul.mubr.f32.gmra.mxu0 %v893
        %v1266 = vpop.f32.mrf.mxu0
        %v1267 = vadd.f32 0.0, %v1266
        %v1268 = vpop.f32.mrf.mxu0
        %1269 = vdwg.mxu0
        %v1270 = vmul.f32 %v962, %v962
        %v1271 = vmul.f32 %v967, %v967
        %v1272 = vmul.f32 %v1037, %v1037
        %v1273 = vmul.f32 %v1042, %v1042
        %v1274 = vmul.f32 %v962, %v1037
        %v1275 = vmul.f32 %v967, %v1042
        %v1276 = vsub.f32 %v1112, %v1270
        %v1277 = vsub.f32 %v1117, %v1271
        %v1278 = vsub.f32 %v1187, %v1272
        %v1279 = vsub.f32 %v1192, %v1273
        %v1280 = vsub.f32 %v1262, %v1274
        %v1281 = vsub.f32 %v1267, %v1275
        %v1282 = vmul.f32 %v1274, 2.0
        %v1283 = vmul.f32 %v1275, 2.0
        %v1284 = vadd.f32 %v1282, 0.0001
        %v1285 = vadd.f32 %v1283, 0.0001
        %v1286 = vmul.f32 %v1280, 2.0
        %v1287 = vmul.f32 %v1281, 2.0
        %v1288 = vadd.f32 %v1286, 0.0009
        %v1289 = vadd.f32 %v1287, 0.0009
        %v1290 = vmul.f32 %v1284, %v1288
        %v1291 = vmul.f32 %v1285, %v1289
        %v1292 = vadd.f32 %v1270, %v1272
        %v1293 = vadd.f32 %v1271, %v1273
        %v1294 = vadd.f32 %v1292, 0.0001
        %v1295 = vadd.f32 %v1293, 0.0001
        %v1296 = vadd.f32 %v1276, %v1278
        %v1297 = vadd.f32 %v1277, %v1279
        %v1298 = vadd.f32 %v1296, 0.0009
        %v1299 = vadd.f32 %v1297, 0.0009
        %v1300 = vmul.f32 %v1294, %v1298
        %v1301 = vmul.f32 %v1295, %v1299
        %v1302 = vrcp.pop %v1300
        %v1303 = vmul.f32 %v1290, %v1302
        %v1304 = vrcp.pop %v1301
        %v1305 = vmul.f32 %v1291, %v1304
        %v1306 = vadd.f32 %v1303, 0.0
        %v1307 = vadd.f32 %v1305, 0.0
        %1308 = vmatprep.subr.mxu0 0.0
        %1309 = vmatpush1.msra.mxu0 0.0
        %1310 = vmatprep.subr.mxu0 0.0
        %1311 = vmatpush1.msra.mxu0 0.0
        %1312 = vmatprep.subr.mxu0 0.0
        %1313 = vmatpush1.msra.mxu0 0.0
        %1314 = vmatprep.subr.mxu0 0.0
        %1315 = vmatpush1.msra.mxu0 0.0
        %1316 = vmatprep.subr.mxu0 0.0
        %1317 = vmatpush1.msra.mxu0 0.0
        %1318 = vmatprep.subr.mxu0 0.0
        %1319 = vmatpush1.msra.mxu0 0.0
        %1320 = vmatprep.subr.mxu0 0.0
        %1321 = vmatpush1.msra.mxu0 0.0
        %1322 = vmatprep.subr.mxu0 0.0
        %1323 = vmatpush1.msra.mxu0 0.0
        %1324 = vmatprep.subr.mxu0 0.0
        %1325 = vmatpush1.msra.mxu0 0.0
        %1326 = vmatprep.subr.mxu0 0.0
        %1327 = vmatpush1.msra.mxu0 0.0
        %1328 = vmatprep.subr.mxu0 0.0
        %1329 = vmatpush1.msra.mxu0 0.0
        %1330 = vmatprep.subr.mxu0 0.0
        %1331 = vmatpush1.msra.mxu0 0.0
        %1332 = vmatprep.subr.mxu0 0.0
        %1333 = vmatpush1.msra.mxu0 0.0
        %1334 = vmatprep.subr.mxu0 0.0
        %1335 = vmatpush1.msra.mxu0 0.0
        %1336 = vmatprep.subr.mxu0 0.0
        %1337 = vmatpush1.msra.mxu0 %v406
        %1338 = vmatprep.subr.mxu0 0.0
        %1339 = vmatpush1.msra.mxu0 %v401
        %1340 = vmatprep.subr.mxu0 0.0
        %1341 = vmatpush2.msra.mxu0 0.0
        %1342 = vmatprep.subr.mxu0 0.0
        %1343 = vmatpush2.msra.mxu0 0.0
        %1344 = vmatprep.subr.mxu0 0.0
        %1345 = vmatpush2.msra.mxu0 0.0
        %1346 = vmatprep.subr.mxu0 0.0
        %1347 = vmatpush2.msra.mxu0 0.0
        %1348 = vmatprep.subr.mxu0 0.0
        %1349 = vmatpush2.msra.mxu0 0.0
        %1350 = vmatprep.subr.mxu0 0.0
        %1351 = vmatpush2.msra.mxu0 0.0
        %1352 = vmatprep.subr.mxu0 0.0
        %1353 = vmatpush2.msra.mxu0 0.0
        %1354 = vmatprep.subr.mxu0 0.0
        %1355 = vmatpush2.msra.mxu0 0.0
        %1356 = vmatprep.subr.mxu0 0.0
        %1357 = vmatpush2.msra.mxu0 0.0
        %1358 = vmatprep.subr.mxu0 0.0
        %1359 = vmatpush2.msra.mxu0 0.0
        %1360 = vmatprep.subr.mxu0 0.0
        %1361 = vmatpush2.msra.mxu0 0.0
        %1362 = vmatprep.subr.mxu0 0.0
        %1363 = vmatpush2.msra.mxu0 0.0
        %1364 = vmatprep.subr.mxu0 0.0
        %1365 = vmatpush2.msra.mxu0 0.0
        %1366 = vmatprep.subr.mxu0 0.0
        %1367 = vmatpush2.msra.mxu0 0.0
        %1368 = vmatprep.subr.mxu0 0.0
        %1369 = vmatpush2.msra.mxu0 0.0
        %1370 = vmatprep.subr.mxu0 0.0
        %1371 = vmatpush2.msra.mxu0 0.0
        %1372 = vmatprep.mubr.f32.mxu0 0.0
        %1373 = vmatmul.mubr.f32.gmra.mxu0 %v890
        %v1374 = vpop.f32.mrf.mxu0
        %v1375 = vadd.f32 0.0, %v1374
        %v1376 = vpop.f32.mrf.mxu0
        %1377 = vmatprep.mubr.f32.mxu0 0.0
        %1378 = vmatmul.mubr.f32.gmra.mxu0 %v893
        %v1379 = vpop.f32.mrf.mxu0
        %v1380 = vadd.f32 0.0, %v1379
        %v1381 = vpop.f32.mrf.mxu0
        %1382 = vdwg.mxu0
        %1383 = vmatprep.subr.mxu0 0.0
        %1384 = vmatpush1.msra.mxu0 0.0
        %1385 = vmatprep.subr.mxu0 0.0
        %1386 = vmatpush1.msra.mxu0 0.0
        %1387 = vmatprep.subr.mxu0 0.0
        %1388 = vmatpush1.msra.mxu0 0.0
        %1389 = vmatprep.subr.mxu0 0.0
        %1390 = vmatpush1.msra.mxu0 0.0
        %1391 = vmatprep.subr.mxu0 0.0
        %1392 = vmatpush1.msra.mxu0 0.0
        %1393 = vmatprep.subr.mxu0 0.0
        %1394 = vmatpush1.msra.mxu0 0.0
        %1395 = vmatprep.subr.mxu0 0.0
        %1396 = vmatpush1.msra.mxu0 0.0
        %1397 = vmatprep.subr.mxu0 0.0
        %1398 = vmatpush1.msra.mxu0 0.0
        %1399 = vmatprep.subr.mxu0 0.0
        %1400 = vmatpush1.msra.mxu0 0.0
        %1401 = vmatprep.subr.mxu0 0.0
        %1402 = vmatpush1.msra.mxu0 0.0
        %1403 = vmatprep.subr.mxu0 0.0
        %1404 = vmatpush1.msra.mxu0 0.0
        %1405 = vmatprep.subr.mxu0 0.0
        %1406 = vmatpush1.msra.mxu0 0.0
        %1407 = vmatprep.subr.mxu0 0.0
        %1408 = vmatpush1.msra.mxu0 0.0
        %1409 = vmatprep.subr.mxu0 0.0
        %1410 = vmatpush1.msra.mxu0 0.0
        %1411 = vmatprep.subr.mxu0 0.0
        %1412 = vmatpush1.msra.mxu0 %v519
        %1413 = vmatprep.subr.mxu0 0.0
        %1414 = vmatpush1.msra.mxu0 %v514
        %1415 = vmatprep.subr.mxu0 0.0
        %1416 = vmatpush2.msra.mxu0 0.0
        %1417 = vmatprep.subr.mxu0 0.0
        %1418 = vmatpush2.msra.mxu0 0.0
        %1419 = vmatprep.subr.mxu0 0.0
        %1420 = vmatpush2.msra.mxu0 0.0
        %1421 = vmatprep.subr.mxu0 0.0
        %1422 = vmatpush2.msra.mxu0 0.0
        %1423 = vmatprep.subr.mxu0 0.0
        %1424 = vmatpush2.msra.mxu0 0.0
        %1425 = vmatprep.subr.mxu0 0.0
        %1426 = vmatpush2.msra.mxu0 0.0
        %1427 = vmatprep.subr.mxu0 0.0
        %1428 = vmatpush2.msra.mxu0 0.0
        %1429 = vmatprep.subr.mxu0 0.0
        %1430 = vmatpush2.msra.mxu0 0.0
        %1431 = vmatprep.subr.mxu0 0.0
        %1432 = vmatpush2.msra.mxu0 0.0
        %1433 = vmatprep.subr.mxu0 0.0
        %1434 = vmatpush2.msra.mxu0 0.0
        %1435 = vmatprep.subr.mxu0 0.0
        %1436 = vmatpush2.msra.mxu0 0.0
        %1437 = vmatprep.subr.mxu0 0.0
        %1438 = vmatpush2.msra.mxu0 0.0
        %1439 = vmatprep.subr.mxu0 0.0
        %1440 = vmatpush2.msra.mxu0 0.0
        %1441 = vmatprep.subr.mxu0 0.0
        %1442 = vmatpush2.msra.mxu0 0.0
        %1443 = vmatprep.subr.mxu0 0.0
        %1444 = vmatpush2.msra.mxu0 0.0
        %1445 = vmatprep.subr.mxu0 0.0
        %1446 = vmatpush2.msra.mxu0 0.0
        %1447 = vmatprep.mubr.f32.mxu0 0.0
        %1448 = vmatmul.mubr.f32.gmra.mxu0 %v890
        %v1449 = vpop.f32.mrf.mxu0
        %v1450 = vadd.f32 0.0, %v1449
        %v1451 = vpop.f32.mrf.mxu0
        %1452 = vmatprep.mubr.f32.mxu0 0.0
        %1453 = vmatmul.mubr.f32.gmra.mxu0 %v893
        %v1454 = vpop.f32.mrf.mxu0
        %v1455 = vadd.f32 0.0, %v1454
        %v1456 = vpop.f32.mrf.mxu0
        %1457 = vdwg.mxu0
        %1458 = vmatprep.subr.mxu0 0.0
        %1459 = vmatpush1.msra.mxu0 0.0
        %1460 = vmatprep.subr.mxu0 0.0
        %1461 = vmatpush1.msra.mxu0 0.0
        %1462 = vmatprep.subr.mxu0 0.0
        %1463 = vmatpush1.msra.mxu0 0.0
        %1464 = vmatprep.subr.mxu0 0.0
        %1465 = vmatpush1.msra.mxu0 0.0
        %1466 = vmatprep.subr.mxu0 0.0
        %1467 = vmatpush1.msra.mxu0 0.0
        %1468 = vmatprep.subr.mxu0 0.0
        %1469 = vmatpush1.msra.mxu0 0.0
        %1470 = vmatprep.subr.mxu0 0.0
        %1471 = vmatpush1.msra.mxu0 0.0
        %1472 = vmatprep.subr.mxu0 0.0
        %1473 = vmatpush1.msra.mxu0 0.0
        %1474 = vmatprep.subr.mxu0 0.0
        %1475 = vmatpush1.msra.mxu0 0.0
        %1476 = vmatprep.subr.mxu0 0.0
        %1477 = vmatpush1.msra.mxu0 0.0
        %1478 = vmatprep.subr.mxu0 0.0
        %1479 = vmatpush1.msra.mxu0 0.0
        %1480 = vmatprep.subr.mxu0 0.0
        %1481 = vmatpush1.msra.mxu0 0.0
        %1482 = vmatprep.subr.mxu0 0.0
        %1483 = vmatpush1.msra.mxu0 0.0
        %1484 = vmatprep.subr.mxu0 0.0
        %1485 = vmatpush1.msra.mxu0 0.0
        %1486 = vmatprep.subr.mxu0 0.0
        %1487 = vmatpush1.msra.mxu0 %v638
        %1488 = vmatprep.subr.mxu0 0.0
        %1489 = vmatpush1.msra.mxu0 %v633
        %1490 = vmatprep.subr.mxu0 0.0
        %1491 = vmatpush2.msra.mxu0 0.0
        %1492 = vmatprep.subr.mxu0 0.0
        %1493 = vmatpush2.msra.mxu0 0.0
        %1494 = vmatprep.subr.mxu0 0.0
        %1495 = vmatpush2.msra.mxu0 0.0
        %1496 = vmatprep.subr.mxu0 0.0
        %1497 = vmatpush2.msra.mxu0 0.0
        %1498 = vmatprep.subr.mxu0 0.0
        %1499 = vmatpush2.msra.mxu0 0.0
        %1500 = vmatprep.subr.mxu0 0.0
        %1501 = vmatpush2.msra.mxu0 0.0
        %1502 = vmatprep.subr.mxu0 0.0
        %1503 = vmatpush2.msra.mxu0 0.0
        %1504 = vmatprep.subr.mxu0 0.0
        %1505 = vmatpush2.msra.mxu0 0.0
        %1506 = vmatprep.subr.mxu0 0.0
        %1507 = vmatpush2.msra.mxu0 0.0
        %1508 = vmatprep.subr.mxu0 0.0
        %1509 = vmatpush2.msra.mxu0 0.0
        %1510 = vmatprep.subr.mxu0 0.0
        %1511 = vmatpush2.msra.mxu0 0.0
        %1512 = vmatprep.subr.mxu0 0.0
        %1513 = vmatpush2.msra.mxu0 0.0
        %1514 = vmatprep.subr.mxu0 0.0
        %1515 = vmatpush2.msra.mxu0 0.0
        %1516 = vmatprep.subr.mxu0 0.0
        %1517 = vmatpush2.msra.mxu0 0.0
        %1518 = vmatprep.subr.mxu0 0.0
        %1519 = vmatpush2.msra.mxu0 0.0
        %1520 = vmatprep.subr.mxu0 0.0
        %1521 = vmatpush2.msra.mxu0 0.0
        %1522 = vmatprep.mubr.f32.mxu0 0.0
        %1523 = vmatmul.mubr.f32.gmra.mxu0 %v890
        %v1524 = vpop.f32.mrf.mxu0
        %v1525 = vadd.f32 0.0, %v1524
        %v1526 = vpop.f32.mrf.mxu0
        %1527 = vmatprep.mubr.f32.mxu0 0.0
        %1528 = vmatmul.mubr.f32.gmra.mxu0 %v893
        %v1529 = vpop.f32.mrf.mxu0
        %v1530 = vadd.f32 0.0, %v1529
        %v1531 = vpop.f32.mrf.mxu0
        %1532 = vdwg.mxu0
        %1533 = vmatprep.subr.mxu0 0.0
        %1534 = vmatpush1.msra.mxu0 0.0
        %1535 = vmatprep.subr.mxu0 0.0
        %1536 = vmatpush1.msra.mxu0 0.0
        %1537 = vmatprep.subr.mxu0 0.0
        %1538 = vmatpush1.msra.mxu0 0.0
        %1539 = vmatprep.subr.mxu0 0.0
        %1540 = vmatpush1.msra.mxu0 0.0
        %1541 = vmatprep.subr.mxu0 0.0
        %1542 = vmatpush1.msra.mxu0 0.0
        %1543 = vmatprep.subr.mxu0 0.0
        %1544 = vmatpush1.msra.mxu0 0.0
        %1545 = vmatprep.subr.mxu0 0.0
        %1546 = vmatpush1.msra.mxu0 0.0
        %1547 = vmatprep.subr.mxu0 0.0
        %1548 = vmatpush1.msra.mxu0 0.0
        %1549 = vmatprep.subr.mxu0 0.0
        %1550 = vmatpush1.msra.mxu0 0.0
        %1551 = vmatprep.subr.mxu0 0.0
        %1552 = vmatpush1.msra.mxu0 0.0
        %1553 = vmatprep.subr.mxu0 0.0
        %1554 = vmatpush1.msra.mxu0 0.0
        %1555 = vmatprep.subr.mxu0 0.0
        %1556 = vmatpush1.msra.mxu0 0.0
        %1557 = vmatprep.subr.mxu0 0.0
        %1558 = vmatpush1.msra.mxu0 0.0
        %1559 = vmatprep.subr.mxu0 0.0
        %1560 = vmatpush1.msra.mxu0 0.0
        %1561 = vmatprep.subr.mxu0 0.0
        %1562 = vmatpush1.msra.mxu0 %v757
        %1563 = vmatprep.subr.mxu0 0.0
        %1564 = vmatpush1.msra.mxu0 %v752
        %1565 = vmatprep.subr.mxu0 0.0
        %1566 = vmatpush2.msra.mxu0 0.0
        %1567 = vmatprep.subr.mxu0 0.0
        %1568 = vmatpush2.msra.mxu0 0.0
        %1569 = vmatprep.subr.mxu0 0.0
        %1570 = vmatpush2.msra.mxu0 0.0
        %1571 = vmatprep.subr.mxu0 0.0
        %1572 = vmatpush2.msra.mxu0 0.0
        %1573 = vmatprep.subr.mxu0 0.0
        %1574 = vmatpush2.msra.mxu0 0.0
        %1575 = vmatprep.subr.mxu0 0.0
        %1576 = vmatpush2.msra.mxu0 0.0
        %1577 = vmatprep.subr.mxu0 0.0
        %1578 = vmatpush2.msra.mxu0 0.0
        %1579 = vmatprep.subr.mxu0 0.0
        %1580 = vmatpush2.msra.mxu0 0.0
        %1581 = vmatprep.subr.mxu0 0.0
        %1582 = vmatpush2.msra.mxu0 0.0
        %1583 = vmatprep.subr.mxu0 0.0
        %1584 = vmatpush2.msra.mxu0 0.0
        %1585 = vmatprep.subr.mxu0 0.0
        %1586 = vmatpush2.msra.mxu0 0.0
        %1587 = vmatprep.subr.mxu0 0.0
        %1588 = vmatpush2.msra.mxu0 0.0
        %1589 = vmatprep.subr.mxu0 0.0
        %1590 = vmatpush2.msra.mxu0 0.0
        %1591 = vmatprep.subr.mxu0 0.0
        %1592 = vmatpush2.msra.mxu0 0.0
        %1593 = vmatprep.subr.mxu0 0.0
        %1594 = vmatpush2.msra.mxu0 0.0
        %1595 = vmatprep.subr.mxu0 0.0
        %1596 = vmatpush2.msra.mxu0 0.0
        %1597 = vmatprep.mubr.f32.mxu0 0.0
        %1598 = vmatmul.mubr.f32.gmra.mxu0 %v890
        %v1599 = vpop.f32.mrf.mxu0
        %v1600 = vadd.f32 0.0, %v1599
        %v1601 = vpop.f32.mrf.mxu0
        %1602 = vmatprep.mubr.f32.mxu0 0.0
        %1603 = vmatmul.mubr.f32.gmra.mxu0 %v893
        %v1604 = vpop.f32.mrf.mxu0
        %v1605 = vadd.f32 0.0, %v1604
        %v1606 = vpop.f32.mrf.mxu0
        %1607 = vdwg.mxu0
        %1608 = vmatprep.subr.mxu0 0.0
        %1609 = vmatpush1.msra.mxu0 0.0
        %1610 = vmatprep.subr.mxu0 0.0
        %1611 = vmatpush1.msra.mxu0 0.0
        %1612 = vmatprep.subr.mxu0 0.0
        %1613 = vmatpush1.msra.mxu0 0.0
        %1614 = vmatprep.subr.mxu0 0.0
        %1615 = vmatpush1.msra.mxu0 0.0
        %1616 = vmatprep.subr.mxu0 0.0
        %1617 = vmatpush1.msra.mxu0 0.0
        %1618 = vmatprep.subr.mxu0 0.0
        %1619 = vmatpush1.msra.mxu0 0.0
        %1620 = vmatprep.subr.mxu0 0.0
        %1621 = vmatpush1.msra.mxu0 0.0
        %1622 = vmatprep.subr.mxu0 0.0
        %1623 = vmatpush1.msra.mxu0 0.0
        %1624 = vmatprep.subr.mxu0 0.0
        %1625 = vmatpush1.msra.mxu0 0.0
        %1626 = vmatprep.subr.mxu0 0.0
        %1627 = vmatpush1.msra.mxu0 0.0
        %1628 = vmatprep.subr.mxu0 0.0
        %1629 = vmatpush1.msra.mxu0 0.0
        %1630 = vmatprep.subr.mxu0 0.0
        %1631 = vmatpush1.msra.mxu0 0.0
        %1632 = vmatprep.subr.mxu0 0.0
        %1633 = vmatpush1.msra.mxu0 0.0
        %1634 = vmatprep.subr.mxu0 0.0
        %1635 = vmatpush1.msra.mxu0 0.0
        %1636 = vmatprep.subr.mxu0 0.0
        %1637 = vmatpush1.msra.mxu0 %v876
        %1638 = vmatprep.subr.mxu0 0.0
        %1639 = vmatpush1.msra.mxu0 %v871
        %1640 = vmatprep.subr.mxu0 0.0
        %1641 = vmatpush2.msra.mxu0 0.0
        %1642 = vmatprep.subr.mxu0 0.0
        %1643 = vmatpush2.msra.mxu0 0.0
        %1644 = vmatprep.subr.mxu0 0.0
        %1645 = vmatpush2.msra.mxu0 0.0
        %1646 = vmatprep.subr.mxu0 0.0
        %1647 = vmatpush2.msra.mxu0 0.0
        %1648 = vmatprep.subr.mxu0 0.0
        %1649 = vmatpush2.msra.mxu0 0.0
        %1650 = vmatprep.subr.mxu0 0.0
        %1651 = vmatpush2.msra.mxu0 0.0
        %1652 = vmatprep.subr.mxu0 0.0
        %1653 = vmatpush2.msra.mxu0 0.0
        %1654 = vmatprep.subr.mxu0 0.0
        %1655 = vmatpush2.msra.mxu0 0.0
        %1656 = vmatprep.subr.mxu0 0.0
        %1657 = vmatpush2.msra.mxu0 0.0
        %1658 = vmatprep.subr.mxu0 0.0
        %1659 = vmatpush2.msra.mxu0 0.0
        %1660 = vmatprep.subr.mxu0 0.0
        %1661 = vmatpush2.msra.mxu0 0.0
        %1662 = vmatprep.subr.mxu0 0.0
        %1663 = vmatpush2.msra.mxu0 0.0
        %1664 = vmatprep.subr.mxu0 0.0
        %1665 = vmatpush2.msra.mxu0 0.0
        %1666 = vmatprep.subr.mxu0 0.0
        %1667 = vmatpush2.msra.mxu0 0.0
        %1668 = vmatprep.subr.mxu0 0.0
        %1669 = vmatpush2.msra.mxu0 0.0
        %1670 = vmatprep.subr.mxu0 0.0
        %1671 = vmatpush2.msra.mxu0 0.0
        %1672 = vmatprep.mubr.f32.mxu0 0.0
        %1673 = vmatmul.mubr.f32.gmra.mxu0 %v890
        %v1674 = vpop.f32.mrf.mxu0
        %v1675 = vadd.f32 0.0, %v1674
        %v1676 = vpop.f32.mrf.mxu0
        %1677 = vmatprep.mubr.f32.mxu0 0.0
        %1678 = vmatmul.mubr.f32.gmra.mxu0 %v893
        %v1679 = vpop.f32.mrf.mxu0
        %v1680 = vadd.f32 0.0, %v1679
        %v1681 = vpop.f32.mrf.mxu0
        %1682 = vdwg.mxu0
        %v1683 = vmul.f32 %v1375, %v1375
        %v1684 = vmul.f32 %v1380, %v1380
        %v1685 = vmul.f32 %v1450, %v1450
        %v1686 = vmul.f32 %v1455, %v1455
        %v1687 = vmul.f32 %v1375, %v1450
        %v1688 = vmul.f32 %v1380, %v1455
        %v1689 = vsub.f32 %v1525, %v1683
        %v1690 = vsub.f32 %v1530, %v1684
        %v1691 = vsub.f32 %v1600, %v1685
        %v1692 = vsub.f32 %v1605, %v1686
        %v1693 = vsub.f32 %v1675, %v1687
        %v1694 = vsub.f32 %v1680, %v1688
        %v1695 = vmul.f32 %v1687, 2.0
        %v1696 = vmul.f32 %v1688, 2.0
        %v1697 = vadd.f32 %v1695, 0.0001
        %v1698 = vadd.f32 %v1696, 0.0001
        %v1699 = vmul.f32 %v1693, 2.0
        %v1700 = vmul.f32 %v1694, 2.0
        %v1701 = vadd.f32 %v1699, 0.0009
        %v1702 = vadd.f32 %v1700, 0.0009
        %v1703 = vmul.f32 %v1697, %v1701
        %v1704 = vmul.f32 %v1698, %v1702
        %v1705 = vadd.f32 %v1683, %v1685
        %v1706 = vadd.f32 %v1684, %v1686
        %v1707 = vadd.f32 %v1705, 0.0001
        %v1708 = vadd.f32 %v1706, 0.0001
        %v1709 = vadd.f32 %v1689, %v1691
        %v1710 = vadd.f32 %v1690, %v1692
        %v1711 = vadd.f32 %v1709, 0.0009
        %v1712 = vadd.f32 %v1710, 0.0009
        %v1713 = vmul.f32 %v1707, %v1711
        %v1714 = vmul.f32 %v1708, %v1712
        %v1715 = vrcp.pop %v1713
        %v1716 = vmul.f32 %v1703, %v1715
        %v1717 = vrcp.pop %v1714
        %v1718 = vmul.f32 %v1704, %v1717
        %v1719 = vadd.f32 %v1306, %v1716
        %v1720 = vadd.f32 %v1307, %v1718
        %1721 = vmatprep.subr.mxu0 0.0
        %1722 = vmatpush1.msra.mxu0 0.0
        %1723 = vmatprep.subr.mxu0 0.0
        %1724 = vmatpush1.msra.mxu0 0.0
        %1725 = vmatprep.subr.mxu0 0.0
        %1726 = vmatpush1.msra.mxu0 0.0
        %1727 = vmatprep.subr.mxu0 0.0
        %1728 = vmatpush1.msra.mxu0 0.0
        %1729 = vmatprep.subr.mxu0 0.0
        %1730 = vmatpush1.msra.mxu0 0.0
        %1731 = vmatprep.subr.mxu0 0.0
        %1732 = vmatpush1.msra.mxu0 0.0
        %1733 = vmatprep.subr.mxu0 0.0
        %1734 = vmatpush1.msra.mxu0 0.0
        %1735 = vmatprep.subr.mxu0 0.0
        %1736 = vmatpush1.msra.mxu0 0.0
        %1737 = vmatprep.subr.mxu0 0.0
        %1738 = vmatpush1.msra.mxu0 0.0
        %1739 = vmatprep.subr.mxu0 0.0
        %1740 = vmatpush1.msra.mxu0 0.0
        %1741 = vmatprep.subr.mxu0 0.0
        %1742 = vmatpush1.msra.mxu0 0.0
        %1743 = vmatprep.subr.mxu0 0.0
        %1744 = vmatpush1.msra.mxu0 0.0
        %1745 = vmatprep.subr.mxu0 0.0
        %1746 = vmatpush1.msra.mxu0 0.0
        %1747 = vmatprep.subr.mxu0 0.0
        %1748 = vmatpush1.msra.mxu0 0.0
        %1749 = vmatprep.subr.mxu0 0.0
        %1750 = vmatpush1.msra.mxu0 %v416
        %1751 = vmatprep.subr.mxu0 0.0
        %1752 = vmatpush1.msra.mxu0 %v411
        %1753 = vmatprep.subr.mxu0 0.0
        %1754 = vmatpush2.msra.mxu0 0.0
        %1755 = vmatprep.subr.mxu0 0.0
        %1756 = vmatpush2.msra.mxu0 0.0
        %1757 = vmatprep.subr.mxu0 0.0
        %1758 = vmatpush2.msra.mxu0 0.0
        %1759 = vmatprep.subr.mxu0 0.0
        %1760 = vmatpush2.msra.mxu0 0.0
        %1761 = vmatprep.subr.mxu0 0.0
        %1762 = vmatpush2.msra.mxu0 0.0
        %1763 = vmatprep.subr.mxu0 0.0
        %1764 = vmatpush2.msra.mxu0 0.0
        %1765 = vmatprep.subr.mxu0 0.0
        %1766 = vmatpush2.msra.mxu0 0.0
        %1767 = vmatprep.subr.mxu0 0.0
        %1768 = vmatpush2.msra.mxu0 0.0
        %1769 = vmatprep.subr.mxu0 0.0
        %1770 = vmatpush2.msra.mxu0 0.0
        %1771 = vmatprep.subr.mxu0 0.0
        %1772 = vmatpush2.msra.mxu0 0.0
        %1773 = vmatprep.subr.mxu0 0.0
        %1774 = vmatpush2.msra.mxu0 0.0
        %1775 = vmatprep.subr.mxu0 0.0
        %1776 = vmatpush2.msra.mxu0 0.0
        %1777 = vmatprep.subr.mxu0 0.0
        %1778 = vmatpush2.msra.mxu0 0.0
        %1779 = vmatprep.subr.mxu0 0.0
        %1780 = vmatpush2.msra.mxu0 0.0
        %1781 = vmatprep.subr.mxu0 0.0
        %1782 = vmatpush2.msra.mxu0 0.0
        %1783 = vmatprep.subr.mxu0 0.0
        %1784 = vmatpush2.msra.mxu0 0.0
        %1785 = vmatprep.mubr.f32.mxu0 0.0
        %1786 = vmatmul.mubr.f32.gmra.mxu0 %v890
        %v1787 = vpop.f32.mrf.mxu0
        %v1788 = vadd.f32 0.0, %v1787
        %v1789 = vpop.f32.mrf.mxu0
        %1790 = vmatprep.mubr.f32.mxu0 0.0
        %1791 = vmatmul.mubr.f32.gmra.mxu0 %v893
        %v1792 = vpop.f32.mrf.mxu0
        %v1793 = vadd.f32 0.0, %v1792
        %v1794 = vpop.f32.mrf.mxu0
        %1795 = vdwg.mxu0
        %1796 = vmatprep.subr.mxu0 0.0
        %1797 = vmatpush1.msra.mxu0 0.0
        %1798 = vmatprep.subr.mxu0 0.0
        %1799 = vmatpush1.msra.mxu0 0.0
        %1800 = vmatprep.subr.mxu0 0.0
        %1801 = vmatpush1.msra.mxu0 0.0
        %1802 = vmatprep.subr.mxu0 0.0
        %1803 = vmatpush1.msra.mxu0 0.0
        %1804 = vmatprep.subr.mxu0 0.0
        %1805 = vmatpush1.msra.mxu0 0.0
        %1806 = vmatprep.subr.mxu0 0.0
        %1807 = vmatpush1.msra.mxu0 0.0
        %1808 = vmatprep.subr.mxu0 0.0
        %1809 = vmatpush1.msra.mxu0 0.0
        %1810 = vmatprep.subr.mxu0 0.0
        %1811 = vmatpush1.msra.mxu0 0.0
        %1812 = vmatprep.subr.mxu0 0.0
        %1813 = vmatpush1.msra.mxu0 0.0
        %1814 = vmatprep.subr.mxu0 0.0
        %1815 = vmatpush1.msra.mxu0 0.0
        %1816 = vmatprep.subr.mxu0 0.0
        %1817 = vmatpush1.msra.mxu0 0.0
        %1818 = vmatprep.subr.mxu0 0.0
        %1819 = vmatpush1.msra.mxu0 0.0
        %1820 = vmatprep.subr.mxu0 0.0
        %1821 = vmatpush1.msra.mxu0 0.0
        %1822 = vmatprep.subr.mxu0 0.0
        %1823 = vmatpush1.msra.mxu0 0.0
        %1824 = vmatprep.subr.mxu0 0.0
        %1825 = vmatpush1.msra.mxu0 %v529
        %1826 = vmatprep.subr.mxu0 0.0
        %1827 = vmatpush1.msra.mxu0 %v524
        %1828 = vmatprep.subr.mxu0 0.0
        %1829 = vmatpush2.msra.mxu0 0.0
        %1830 = vmatprep.subr.mxu0 0.0
        %1831 = vmatpush2.msra.mxu0 0.0
        %1832 = vmatprep.subr.mxu0 0.0
        %1833 = vmatpush2.msra.mxu0 0.0
        %1834 = vmatprep.subr.mxu0 0.0
        %1835 = vmatpush2.msra.mxu0 0.0
        %1836 = vmatprep.subr.mxu0 0.0
        %1837 = vmatpush2.msra.mxu0 0.0
        %1838 = vmatprep.subr.mxu0 0.0
        %1839 = vmatpush2.msra.mxu0 0.0
        %1840 = vmatprep.subr.mxu0 0.0
        %1841 = vmatpush2.msra.mxu0 0.0
        %1842 = vmatprep.subr.mxu0 0.0
        %1843 = vmatpush2.msra.mxu0 0.0
        %1844 = vmatprep.subr.mxu0 0.0
        %1845 = vmatpush2.msra.mxu0 0.0
        %1846 = vmatprep.subr.mxu0 0.0
        %1847 = vmatpush2.msra.mxu0 0.0
        %1848 = vmatprep.subr.mxu0 0.0
        %1849 = vmatpush2.msra.mxu0 0.0
        %1850 = vmatprep.subr.mxu0 0.0
        %1851 = vmatpush2.msra.mxu0 0.0
        %1852 = vmatprep.subr.mxu0 0.0
        %1853 = vmatpush2.msra.mxu0 0.0
        %1854 = vmatprep.subr.mxu0 0.0
        %1855 = vmatpush2.msra.mxu0 0.0
        %1856 = vmatprep.subr.mxu0 0.0
        %1857 = vmatpush2.msra.mxu0 0.0
        %1858 = vmatprep.subr.mxu0 0.0
        %1859 = vmatpush2.msra.mxu0 0.0
        %1860 = vmatprep.mubr.f32.mxu0 0.0
        %1861 = vmatmul.mubr.f32.gmra.mxu0 %v890
        %v1862 = vpop.f32.mrf.mxu0
        %v1863 = vadd.f32 0.0, %v1862
        %v1864 = vpop.f32.mrf.mxu0
        %1865 = vmatprep.mubr.f32.mxu0 0.0
        %1866 = vmatmul.mubr.f32.gmra.mxu0 %v893
        %v1867 = vpop.f32.mrf.mxu0
        %v1868 = vadd.f32 0.0, %v1867
        %v1869 = vpop.f32.mrf.mxu0
        %1870 = vdwg.mxu0
        %1871 = vmatprep.subr.mxu0 0.0
        %1872 = vmatpush1.msra.mxu0 0.0
        %1873 = vmatprep.subr.mxu0 0.0
        %1874 = vmatpush1.msra.mxu0 0.0
        %1875 = vmatprep.subr.mxu0 0.0
        %1876 = vmatpush1.msra.mxu0 0.0
        %1877 = vmatprep.subr.mxu0 0.0
        %1878 = vmatpush1.msra.mxu0 0.0
        %1879 = vmatprep.subr.mxu0 0.0
        %1880 = vmatpush1.msra.mxu0 0.0
        %1881 = vmatprep.subr.mxu0 0.0
        %1882 = vmatpush1.msra.mxu0 0.0
        %1883 = vmatprep.subr.mxu0 0.0
        %1884 = vmatpush1.msra.mxu0 0.0
        %1885 = vmatprep.subr.mxu0 0.0
        %1886 = vmatpush1.msra.mxu0 0.0
        %1887 = vmatprep.subr.mxu0 0.0
        %1888 = vmatpush1.msra.mxu0 0.0
        %1889 = vmatprep.subr.mxu0 0.0
        %1890 = vmatpush1.msra.mxu0 0.0
        %1891 = vmatprep.subr.mxu0 0.0
        %1892 = vmatpush1.msra.mxu0 0.0
        %1893 = vmatprep.subr.mxu0 0.0
        %1894 = vmatpush1.msra.mxu0 0.0
        %1895 = vmatprep.subr.mxu0 0.0
        %1896 = vmatpush1.msra.mxu0 0.0
        %1897 = vmatprep.subr.mxu0 0.0
        %1898 = vmatpush1.msra.mxu0 0.0
        %1899 = vmatprep.subr.mxu0 0.0
        %1900 = vmatpush1.msra.mxu0 %v648
        %1901 = vmatprep.subr.mxu0 0.0
        %1902 = vmatpush1.msra.mxu0 %v643
        %1903 = vmatprep.subr.mxu0 0.0
        %1904 = vmatpush2.msra.mxu0 0.0
        %1905 = vmatprep.subr.mxu0 0.0
        %1906 = vmatpush2.msra.mxu0 0.0
        %1907 = vmatprep.subr.mxu0 0.0
        %1908 = vmatpush2.msra.mxu0 0.0
        %1909 = vmatprep.subr.mxu0 0.0
        %1910 = vmatpush2.msra.mxu0 0.0
        %1911 = vmatprep.subr.mxu0 0.0
        %1912 = vmatpush2.msra.mxu0 0.0
        %1913 = vmatprep.subr.mxu0 0.0
        %1914 = vmatpush2.msra.mxu0 0.0
        %1915 = vmatprep.subr.mxu0 0.0
        %1916 = vmatpush2.msra.mxu0 0.0
        %1917 = vmatprep.subr.mxu0 0.0
        %1918 = vmatpush2.msra.mxu0 0.0
        %1919 = vmatprep.subr.mxu0 0.0
        %1920 = vmatpush2.msra.mxu0 0.0
        %1921 = vmatprep.subr.mxu0 0.0
        %1922 = vmatpush2.msra.mxu0 0.0
        %1923 = vmatprep.subr.mxu0 0.0
        %1924 = vmatpush2.msra.mxu0 0.0
        %1925 = vmatprep.subr.mxu0 0.0
        %1926 = vmatpush2.msra.mxu0 0.0
        %1927 = vmatprep.subr.mxu0 0.0
        %1928 = vmatpush2.msra.mxu0 0.0
        %1929 = vmatprep.subr.mxu0 0.0
        %1930 = vmatpush2.msra.mxu0 0.0
        %1931 = vmatprep.subr.mxu0 0.0
        %1932 = vmatpush2.msra.mxu0 0.0
        %1933 = vmatprep.subr.mxu0 0.0
        %1934 = vmatpush2.msra.mxu0 0.0
        %1935 = vmatprep.mubr.f32.mxu0 0.0
        %1936 = vmatmul.mubr.f32.gmra.mxu0 %v890
        %v1937 = vpop.f32.mrf.mxu0
        %v1938 = vadd.f32 0.0, %v1937
        %v1939 = vpop.f32.mrf.mxu0
        %1940 = vmatprep.mubr.f32.mxu0 0.0
        %1941 = vmatmul.mubr.f32.gmra.mxu0 %v893
        %v1942 = vpop.f32.mrf.mxu0
        %v1943 = vadd.f32 0.0, %v1942
        %v1944 = vpop.f32.mrf.mxu0
        %1945 = vdwg.mxu0
        %1946 = vmatprep.subr.mxu0 0.0
        %1947 = vmatpush1.msra.mxu0 0.0
        %1948 = vmatprep.subr.mxu0 0.0
        %1949 = vmatpush1.msra.mxu0 0.0
        %1950 = vmatprep.subr.mxu0 0.0
        %1951 = vmatpush1.msra.mxu0 0.0
        %1952 = vmatprep.subr.mxu0 0.0
        %1953 = vmatpush1.msra.mxu0 0.0
        %1954 = vmatprep.subr.mxu0 0.0
        %1955 = vmatpush1.msra.mxu0 0.0
        %1956 = vmatprep.subr.mxu0 0.0
        %1957 = vmatpush1.msra.mxu0 0.0
        %1958 = vmatprep.subr.mxu0 0.0
        %1959 = vmatpush1.msra.mxu0 0.0
        %1960 = vmatprep.subr.mxu0 0.0
        %1961 = vmatpush1.msra.mxu0 0.0
        %1962 = vmatprep.subr.mxu0 0.0
        %1963 = vmatpush1.msra.mxu0 0.0
        %1964 = vmatprep.subr.mxu0 0.0
        %1965 = vmatpush1.msra.mxu0 0.0
        %1966 = vmatprep.subr.mxu0 0.0
        %1967 = vmatpush1.msra.mxu0 0.0
        %1968 = vmatprep.subr.mxu0 0.0
        %1969 = vmatpush1.msra.mxu0 0.0
        %1970 = vmatprep.subr.mxu0 0.0
        %1971 = vmatpush1.msra.mxu0 0.0
        %1972 = vmatprep.subr.mxu0 0.0
        %1973 = vmatpush1.msra.mxu0 0.0
        %1974 = vmatprep.subr.mxu0 0.0
        %1975 = vmatpush1.msra.mxu0 %v767
        %1976 = vmatprep.subr.mxu0 0.0
        %1977 = vmatpush1.msra.mxu0 %v762
        %1978 = vmatprep.subr.mxu0 0.0
        %1979 = vmatpush2.msra.mxu0 0.0
        %1980 = vmatprep.subr.mxu0 0.0
        %1981 = vmatpush2.msra.mxu0 0.0
        %1982 = vmatprep.subr.mxu0 0.0
        %1983 = vmatpush2.msra.mxu0 0.0
        %1984 = vmatprep.subr.mxu0 0.0
        %1985 = vmatpush2.msra.mxu0 0.0
        %1986 = vmatprep.subr.mxu0 0.0
        %1987 = vmatpush2.msra.mxu0 0.0
        %1988 = vmatprep.subr.mxu0 0.0
        %1989 = vmatpush2.msra.mxu0 0.0
        %1990 = vmatprep.subr.mxu0 0.0
        %1991 = vmatpush2.msra.mxu0 0.0
        %1992 = vmatprep.subr.mxu0 0.0
        %1993 = vmatpush2.msra.mxu0 0.0
        %1994 = vmatprep.subr.mxu0 0.0
        %1995 = vmatpush2.msra.mxu0 0.0
        %1996 = vmatprep.subr.mxu0 0.0
        %1997 = vmatpush2.msra.mxu0 0.0
        %1998 = vmatprep.subr.mxu0 0.0
        %1999 = vmatpush2.msra.mxu0 0.0
        %2000 = vmatprep.subr.mxu0 0.0
        %2001 = vmatpush2.msra.mxu0 0.0
        %2002 = vmatprep.subr.mxu0 0.0
        %2003 = vmatpush2.msra.mxu0 0.0
        %2004 = vmatprep.subr.mxu0 0.0
        %2005 = vmatpush2.msra.mxu0 0.0
        %2006 = vmatprep.subr.mxu0 0.0
        %2007 = vmatpush2.msra.mxu0 0.0
        %2008 = vmatprep.subr.mxu0 0.0
        %2009 = vmatpush2.msra.mxu0 0.0
        %2010 = vmatprep.mubr.f32.mxu0 0.0
        %2011 = vmatmul.mubr.f32.gmra.mxu0 %v890
        %v2012 = vpop.f32.mrf.mxu0
        %v2013 = vadd.f32 0.0, %v2012
        %v2014 = vpop.f32.mrf.mxu0
        %2015 = vmatprep.mubr.f32.mxu0 0.0
        %2016 = vmatmul.mubr.f32.gmra.mxu0 %v893
        %v2017 = vpop.f32.mrf.mxu0
        %v2018 = vadd.f32 0.0, %v2017
        %v2019 = vpop.f32.mrf.mxu0
        %2020 = vdwg.mxu0
        %2021 = vmatprep.subr.mxu0 0.0
        %2022 = vmatpush1.msra.mxu0 0.0
        %2023 = vmatprep.subr.mxu0 0.0
        %2024 = vmatpush1.msra.mxu0 0.0
        %2025 = vmatprep.subr.mxu0 0.0
        %2026 = vmatpush1.msra.mxu0 0.0
        %2027 = vmatprep.subr.mxu0 0.0
        %2028 = vmatpush1.msra.mxu0 0.0
        %2029 = vmatprep.subr.mxu0 0.0
        %2030 = vmatpush1.msra.mxu0 0.0
        %2031 = vmatprep.subr.mxu0 0.0
        %2032 = vmatpush1.msra.mxu0 0.0
        %2033 = vmatprep.subr.mxu0 0.0
        %2034 = vmatpush1.msra.mxu0 0.0
        %2035 = vmatprep.subr.mxu0 0.0
        %2036 = vmatpush1.msra.mxu0 0.0
        %2037 = vmatprep.subr.mxu0 0.0
        %2038 = vmatpush1.msra.mxu0 0.0
        %2039 = vmatprep.subr.mxu0 0.0
        %2040 = vmatpush1.msra.mxu0 0.0
        %2041 = vmatprep.subr.mxu0 0.0
        %2042 = vmatpush1.msra.mxu0 0.0
        %2043 = vmatprep.subr.mxu0 0.0
        %2044 = vmatpush1.msra.mxu0 0.0
        %2045 = vmatprep.subr.mxu0 0.0
        %2046 = vmatpush1.msra.mxu0 0.0
        %2047 = vmatprep.subr.mxu0 0.0
        %2048 = vmatpush1.msra.mxu0 0.0
        %2049 = vmatprep.subr.mxu0 0.0
        %2050 = vmatpush1.msra.mxu0 %v886
        %2051 = vmatprep.subr.mxu0 0.0
        %2052 = vmatpush1.msra.mxu0 %v881
        %2053 = vmatprep.subr.mxu0 0.0
        %2054 = vmatpush2.msra.mxu0 0.0
        %2055 = vmatprep.subr.mxu0 0.0
        %2056 = vmatpush2.msra.mxu0 0.0
        %2057 = vmatprep.subr.mxu0 0.0
        %2058 = vmatpush2.msra.mxu0 0.0
        %2059 = vmatprep.subr.mxu0 0.0
        %2060 = vmatpush2.msra.mxu0 0.0
        %2061 = vmatprep.subr.mxu0 0.0
        %2062 = vmatpush2.msra.mxu0 0.0
        %2063 = vmatprep.subr.mxu0 0.0
        %2064 = vmatpush2.msra.mxu0 0.0
        %2065 = vmatprep.subr.mxu0 0.0
        %2066 = vmatpush2.msra.mxu0 0.0
        %2067 = vmatprep.subr.mxu0 0.0
        %2068 = vmatpush2.msra.mxu0 0.0
        %2069 = vmatprep.subr.mxu0 0.0
        %2070 = vmatpush2.msra.mxu0 0.0
        %2071 = vmatprep.subr.mxu0 0.0
        %2072 = vmatpush2.msra.mxu0 0.0
        %2073 = vmatprep.subr.mxu0 0.0
        %2074 = vmatpush2.msra.mxu0 0.0
        %2075 = vmatprep.subr.mxu0 0.0
        %2076 = vmatpush2.msra.mxu0 0.0
        %2077 = vmatprep.subr.mxu0 0.0
        %2078 = vmatpush2.msra.mxu0 0.0
        %2079 = vmatprep.subr.mxu0 0.0
        %2080 = vmatpush2.msra.mxu0 0.0
        %2081 = vmatprep.subr.mxu0 0.0
        %2082 = vmatpush2.msra.mxu0 0.0
        %2083 = vmatprep.subr.mxu0 0.0
        %2084 = vmatpush2.msra.mxu0 0.0
        %2085 = vmatprep.mubr.f32.mxu0 0.0
        %2086 = vmatmul.mubr.f32.gmra.mxu0 %v890
        %v2087 = vpop.f32.mrf.mxu0
        %v2088 = vadd.f32 0.0, %v2087
        %v2089 = vpop.f32.mrf.mxu0
        %2090 = vmatprep.mubr.f32.mxu0 0.0
        %2091 = vmatmul.mubr.f32.gmra.mxu0 %v893
        %v2092 = vpop.f32.mrf.mxu0
        %v2093 = vadd.f32 0.0, %v2092
        %v2094 = vpop.f32.mrf.mxu0
        %2095 = vdwg.mxu0
        %v2096 = vmul.f32 %v1788, %v1788
        %v2097 = vmul.f32 %v1793, %v1793
        %v2098 = vmul.f32 %v1863, %v1863
        %v2099 = vmul.f32 %v1868, %v1868
        %v2100 = vmul.f32 %v1788, %v1863
        %v2101 = vmul.f32 %v1793, %v1868
        %v2102 = vsub.f32 %v1938, %v2096
        %v2103 = vsub.f32 %v1943, %v2097
        %v2104 = vsub.f32 %v2013, %v2098
        %v2105 = vsub.f32 %v2018, %v2099
        %v2106 = vsub.f32 %v2088, %v2100
        %v2107 = vsub.f32 %v2093, %v2101
        %v2108 = vmul.f32 %v2100, 2.0
        %v2109 = vmul.f32 %v2101, 2.0
        %v2110 = vadd.f32 %v2108, 0.0001
        %v2111 = vadd.f32 %v2109, 0.0001
        %v2112 = vmul.f32 %v2106, 2.0
        %v2113 = vmul.f32 %v2107, 2.0
        %v2114 = vadd.f32 %v2112, 0.0009
        %v2115 = vadd.f32 %v2113, 0.0009
        %v2116 = vmul.f32 %v2110, %v2114
        %v2117 = vmul.f32 %v2111, %v2115
        %v2118 = vadd.f32 %v2096, %v2098
        %v2119 = vadd.f32 %v2097, %v2099
        %v2120 = vadd.f32 %v2118, 0.0001
        %v2121 = vadd.f32 %v2119, 0.0001
        %v2122 = vadd.f32 %v2102, %v2104
        %v2123 = vadd.f32 %v2103, %v2105
        %v2124 = vadd.f32 %v2122, 0.0009
        %v2125 = vadd.f32 %v2123, 0.0009
        %v2126 = vmul.f32 %v2120, %v2124
        %v2127 = vmul.f32 %v2121, %v2125
        %v2128 = vrcp.pop %v2126
        %v2129 = vmul.f32 %v2116, %v2128
        %v2130 = vrcp.pop %v2127
        %v2131 = vmul.f32 %v2117, %v2130
        %v2132 = vadd.f32 %v1719, %v2129
        %v2133 = vadd.f32 %v1720, %v2131
        %v2134 = vsel %vm305, %v2132, 0.0
        %v2135 = vsel %vm305, %v2133, 0.0
        %v2136 = vadd.f32 %v2134, %v2135
        %2137 = vadd.xlane.f32.xlu0 %v2136
        %v2138 = vpop.xlane.xlu0 %2137
        %v2139 = vrot.slane %v2138, 4
        %v2140 = vadd.f32 %v2138, %v2139
        %v2141 = vrot.slane %v2140, 2
        %v2142 = vadd.f32 %v2140, %v2141
        %v2143 = vrot.slane %v2142, 1
        %v2144 = vadd.f32 %v2142, %v2143
        %s2145 = vtos %v2144
        %v2146 = vlaneseq
        %v2147 = vshrl.u32 %v2146, 7
        %v2148 = vlaneseq
        %v2149 = vand.u32 %v2148, 127
        %vm2150 = vcmp.eq.s32.totalorder %v2147, 0
        %vm2151 = vcmp.eq.s32.totalorder %v2149, 0
        %vm2152 = vmand %vm2150, %vm2151
        %v2153 = vstv %s2145
        %v2154 = vsel %vm2152, %v2153, 0.0
        %2155 = vst [vmem:[%s286] sm:$0xff] %v2154
        %s2156 = sand.u32 %s127, 1
        %s2157 = scalar_lea.sflag [#allocation4], %s2156
        %s2158 = sand.u32 %s127, 1
        %s2159 = smul.addr %s2158, 8
        %s2160 = scalar_lea.vmem [#allocation10], %s2159
        // Predicated region
        $region53: #{tpu_custom_call.1} parent=35 // pred_check
          %p2161 = pneg %p137
        $region54: #{tpu_custom_call.1} parent=35 // pred_check_branch
          %2163 = sbr.rel (%p2161) target = $region56
        $region55: #{tpu_custom_call.1} parent=35 // pred_region
          %s2165 = ssub.s32 128, 128
          %2166 = vsyncadd %s2157, %s2165
          %s2167 = smul.addr %s25, 128
          %s2168 = scalar_lea.hbm %s4, %s2167
          %s2170 = sshll.u32 %s2160, 4
          %s2171 = int_to_ptr.vmem [resolvable:$true] %s2170
          %2173 = dma.vmem_to_hbm [thread:$0]  %s2171, 128, %s2168, %s2157
        $region56: #{tpu_custom_call.1} parent=35 // pred_fallthru
          _
      $region36: #{tpu_custom_call.1} parent=5 // pred_fallthru
        _
      %p2174 = scmp.le.s32.totalorder 2, %s20
      // Predicated region
      $region57: #{tpu_custom_call.1} parent=5 // pred_check
        %p2175 = pneg %p2174
      $region58: #{tpu_custom_call.1} parent=5 // pred_check_branch
        %2177 = sbr.rel (%p2175) target = $region60
      $region59: #{tpu_custom_call.1} parent=5 // pred_region
        %s2178 = ssub.s32 %s20, 2
        // Predicated region
        $region61: #{tpu_custom_call.1} parent=59 // pred_check
          %p2179 = pneg %p143
        $region62: #{tpu_custom_call.1} parent=59 // pred_check_branch
          %2181 = sbr.rel (%p2179) target = $region64
        $region63: #{tpu_custom_call.1} parent=59 // pred_region
          %s2182 = sand.u32 %s128, 1
          %s2183 = scalar_lea.sflag [#allocation4], %s2182
          %s2184 = sand.u32 %s128, 1
          %s2185 = smul.addr %s2184, 8
          %s2186 = scalar_lea.vmem [#allocation10], %s2185
          %2187 = dma.done %s2183, 128
        $region64: #{tpu_custom_call.1} parent=59 // pred_fallthru
          _
      $region60: #{tpu_custom_call.1} parent=5 // pred_fallthru
        _
    $region6: #{tpu_custom_call.1} parent=1 // loop_footer
      %s24 = sadd.s32 1, %s20
    $region7: #{tpu_custom_call.1} parent=1 // loop_footer_branch
      %19 = sbr.rel target = $region3
    $region8: #{tpu_custom_call.1} parent=1 // loop_exit
      _
    %2188 = vsyncpa [#allocation3], 1
    %s2189 = scalar_lea.sflag [#allocation3], 1
    %2190 = vsyncpa %s2189, 1
    %2191 = vsyncpa [#allocation6], 1
    %s2192 = scalar_lea.sflag [#allocation6], 1
    %2193 = vsyncpa %s2192, 1
    %2194 = vsyncpa [#allocation9], 1
    %2195 = vsyncpa [#allocation4], 1
    %s2196 = scalar_lea.sflag [#allocation4], 1
    %2197 = vsyncpa %s2196, 1

</llo_original>
